<compile_context>
chip_gen: v7x
topology: tpu7x:2x2x1
jax: 0.10.0
libtpu: 0.0.40
codegen_flags: <defaults>
</compile_context>

<pallas_src>
import functools

import jax
import jax.numpy as jnp
from jax import lax
from jax.experimental import pallas as pl
from jax.experimental.pallas import tpu as pltpu

# "config" values (the reference module reads them from a global `config`).
KERNEL_SIZE = 3
PADDING = 1
STRIDE = 2
BN_EPS = 1e-5            # BatchNorm2d default; momentum only affects running stats.

LANE = 128
SUBLANE = 8


def _round_up(x, m):
    return (x + m - 1) // m * m


# ---------------------------------------------------------------------------
# Shared in-kernel conv tile: one wide-K MXU matmul for the whole tile.
# ---------------------------------------------------------------------------
def _conv_tile(x_ref, w_ref, H, W):
    # x_ref: (1, H+1, W+1, cin_p) bf16 (zero halo on the high side of H/W)
    # w_ref: (4*cin_p, 4*cout_p)  bf16
    # Build the 2x2-patch im2col once (4 shifted windows -> K = 4*cin_p), then
    # a single matmul producing all 4 output phases, accumulated in f32.
    cin_p = x_ref.shape[-1]
    patches = jnp.concatenate(
        [x_ref[0, i:i + H, j:j + W, :].reshape(H * W, cin_p)
         for i in (0, 1) for j in (0, 1)],
        axis=-1)                                             # (H*W, 4*cin_p)
    return jnp.dot(patches, w_ref[...], preferred_element_type=jnp.float32)


# ---------------------------------------------------------------------------
# Pass 1: conv + single-sweep BatchNorm partial sums (per grid tile).
# ---------------------------------------------------------------------------
def _convt_stats_kernel(x_ref, w_ref, sums_ref, *, H, W, cout_p, op):
    acc = _conv_tile(x_ref, w_ref, H, W)                     # (H*W, 4*cout_p) f32

    if op == 0:
        # out=False: the last output row (phase a=1, m=H-1) and column
        # (b=1, w=W-1) do not exist; exclude them from the batch statistics
        # (those values are sliced away in the wrapper).
        r = lax.broadcasted_iota(jnp.int32, (H * W, 1), 0)
        m_idx = r // W
        w_idx = r % W
        c = lax.broadcasted_iota(jnp.int32, (1, 4 * cout_p), 1)
        blk = c // cout_p
        a = blk // 2
        b = blk % 2
        valid = jnp.logical_and(jnp.logical_or(a == 0, m_idx < H - 1),
                                jnp.logical_or(b == 0, w_idx < W - 1))
        acc = jnp.where(valid, acc, 0.0)

    # One reduction sweep for both sum and sum-of-squares.
    rowsum = jnp.sum(acc, axis=0, keepdims=True)             # (1, 4*cout_p)
    rowsumsq = jnp.sum(jnp.square(acc), axis=0, keepdims=True)

    def fold(v):   # sum the four lane-aligned phase blocks -> per-channel
        return (v[:, 0 * cout_p:1 * cout_p] + v[:, 1 * cout_p:2 * cout_p]
                + v[:, 2 * cout_p:3 * cout_p] + v[:, 3 * cout_p:4 * cout_p])

    sums_ref[0] = jnp.concatenate([fold(rowsum), fold(rowsumsq)], axis=0)


# ---------------------------------------------------------------------------
# Pass 2: recompute conv tile, apply BN scale/shift + ReLU, write once.
# ---------------------------------------------------------------------------
def _convt_apply_kernel(x_ref, w_ref, scale_ref, shift_ref, o_ref, *, H, W):
    acc = _conv_tile(x_ref, w_ref, H, W)                     # (H*W, 4*cout_p) f32
    o_ref[0] = jnp.maximum(acc * scale_ref[...] + shift_ref[...], 0.0)


# ---------------------------------------------------------------------------
# Wrapper (NCHW in / NCHW out, like the PyTorch module)
# ---------------------------------------------------------------------------
@functools.partial(jax.jit, static_argnames=("cout", "out"))
def decoder_block_forward(x_nchw, w_big, gamma, beta, *, cout, out=False):
    k, s, p = KERNEL_SIZE, STRIDE, PADDING
    op = 1 if out else 0
    n, cin, h, w = x_nchw.shape
    cin_p = w_big.shape[0] // 4
    cout_p = w_big.shape[1] // 4

    ho = (h - 1) * s - 2 * p + k + op        # = 2h - 1 + op
    wo = (w - 1) * s - 2 * p + k + op
    hw = h * w

    # Single layout pass on the (small) input: NCHW -> NHWC, +1 zero halo on
    # the high side of H/W, channel pad to cin_p, bf16 operands.
    x = jnp.transpose(x_nchw, (0, 2, 3, 1))
    x = jnp.pad(x, ((0, 0), (0, 1), (0, 1), (0, cin_p - cin))).astype(jnp.bfloat16)

    grid = (n,)
    x_spec = pl.BlockSpec((1, h + 1, w + 1, cin_p), lambda i: (i, 0, 0, 0))
    w_spec = pl.BlockSpec((4 * cin_p, 4 * cout_p), lambda i: (0, 0))
    vec_spec = pl.BlockSpec((1, 4 * cout_p), lambda i: (0, 0))
    params = pltpu.CompilerParams(dimension_semantics=("parallel",))

    flops = 2 * n * ho * wo * cin * cout * (k * k) // (s * s)   # real channels

    # ---- Pass 1: conv + per-tile BN partial sums ---------------------------
    stats = pl.pallas_call(
        functools.partial(_convt_stats_kernel, H=h, W=w, cout_p=cout_p, op=op),
        grid=grid,
        in_specs=[x_spec, w_spec],
        out_specs=pl.BlockSpec((1, 2, cout_p), lambda i: (i, 0, 0)),
        out_shape=jax.ShapeDtypeStruct((n, 2, cout_p), jnp.float32),
        compiler_params=params,
        cost_estimate=pl.CostEstimate(
            flops=flops, transcendentals=0,
            bytes_accessed=x.size * 2 + w_big.size * 2 + n * 2 * cout_p * 4),
    )(x, w_big)

    # ---- Tiny finalize (XLA): batch mean/var -> scale/shift ----------------
    count = n * ho * wo
    sums = jnp.sum(stats, axis=0)                              # (2, cout_p)
    mean = sums[0] / count
    var = jnp.maximum(sums[1] / count - jnp.square(mean), 0.0)  # biased variance
    scale = gamma * lax.rsqrt(var + BN_EPS)
    shift = beta - mean * scale
    scale4 = jnp.tile(scale, 4).reshape(1, 4 * cout_p)
    shift4 = jnp.tile(shift, 4).reshape(1, 4 * cout_p)

    # ---- Pass 2: recompute conv, normalize + ReLU, single lane-dense write -
    y_all = pl.pallas_call(
        functools.partial(_convt_apply_kernel, H=h, W=w),
        grid=grid,
        in_specs=[x_spec, w_spec, vec_spec, vec_spec],
        out_specs=pl.BlockSpec((1, hw, 4 * cout_p), lambda i: (i, 0, 0)),
        out_shape=jax.ShapeDtypeStruct((n, hw, 4 * cout_p), jnp.float32),
        compiler_params=params,
        cost_estimate=pl.CostEstimate(
            flops=flops, transcendentals=0,
            bytes_accessed=(x.size * 2 + w_big.size * 2
                            + 8 * cout_p * 4 + n * hw * 4 * cout_p * 4)),
    )(x, w_big, scale4, shift4)

    # Phase-major (n, h*w, [a,b,c]) -> NCHW with 2x2 sub-pixel interleave.
    y = y_all.reshape(n, h, w, 2, 2, cout_p)[..., :cout]
    y = jnp.transpose(y, (0, 5, 1, 3, 2, 4)).reshape(n, cout, 2 * h, 2 * w)
    return y[:, :, :ho, :wo]


# ---------------------------------------------------------------------------
# Parameter construction (mirrors nn.Module __init__ shapes)
# ---------------------------------------------------------------------------
def init_params(key, channel_in, channel_out):
    k = KERNEL_SIZE
    cin_p = _round_up(channel_in, SUBLANE)
    cout_p = _round_up(channel_out, LANE)
    # PyTorch ConvTranspose2d weight: (C_in, C_out, kH, kW); bias=False.
    w_ct = 0.1 * jax.random.normal(key, (channel_in, channel_out, k, k),
                                   jnp.float32)
    wf = jnp.flip(w_ct, axis=(2, 3))       # wf[:,:,dh,dw] = w_ct[:,:,k-1-dh,k-1-dw]

    # Stride-phase weight slab: rows = (patch offset i,j, cin), cols = (phase
    # a,b, cout).  tap(phase, offset) -> flipped-kernel index (or no tap).
    tap = {(0, 0): 1, (0, 1): None, (1, 0): 0, (1, 1): 2}
    w_big = jnp.zeros((4 * cin_p, 4 * cout_p), jnp.float32)
    for a in (0, 1):
        for b in (0, 1):
            for i in (0, 1):
                for j in (0, 1):
                    dh, dw = tap[(a, i)], tap[(b, j)]
                    if dh is None or dw is None:
                        continue
                    r0 = (i * 2 + j) * cin_p
                    c0 = (a * 2 + b) * cout_p
                    w_big = w_big.at[r0:r0 + channel_in,
                                     c0:c0 + channel_out].set(wf[:, :, dh, dw])

    # gamma zero-padded on the fake channels so padded columns stay exactly 0.
    gamma = jnp.pad(jnp.ones((channel_out,), jnp.float32),
                    (0, cout_p - channel_out))
    beta = jnp.zeros((cout_p,), jnp.float32)
    # TODO(synk): BatchNorm running-stats update (momentum=0.9) is a training
    # side effect and does not affect this forward pass; not implemented.
    return {"w_ct": w_ct, "w_big": w_big.astype(jnp.bfloat16),
            "gamma": gamma, "beta": beta}


# ---------------------------------------------------------------------------
# Pure-XLA reference (f32, HIGHEST precision) for a sanity check
# ---------------------------------------------------------------------------
def _reference(x_nchw, w_ct, out):
    k, s, p = KERNEL_SIZE, STRIDE, PADDING
    op = 1 if out else 0
    w_conv = jnp.transpose(jnp.flip(w_ct, (2, 3)), (1, 0, 2, 3))  # (Cout,Cin,k,k)
    y = lax.conv_general_dilated(
        x_nchw.astype(jnp.float32), w_conv, window_strides=(1, 1),
        padding=[(k - 1 - p, k - 1 - p + op)] * 2, lhs_dilation=(s, s),
        dimension_numbers=("NCHW", "OIHW", "NCHW"),
        precision=lax.Precision.HIGHEST)
    mean = jnp.mean(y, axis=(0, 2, 3), keepdims=True)
    var = jnp.mean(jnp.square(y - mean), axis=(0, 2, 3), keepdims=True)
    yn = (y - mean) * lax.rsqrt(var + BN_EPS)      # gamma=1, beta=0 at init
    return jnp.maximum(yn, 0.0)


if __name__ == "__main__":
    key = jax.random.PRNGKey(0)
    kp, kx = jax.random.split(key)

    channel_in, channel_out = 32, 16
    params = init_params(kp, channel_in, channel_out)

    # PyTorch NCHW input: (batch=2, channels=32, 8, 8).
    x = jax.random.normal(kx, (2, channel_in, 8, 8), jnp.float32)

    for out_flag in (True, False):          # out=True -> 2x upsample (16x16)
        y = decoder_block_forward(x, params["w_big"], params["gamma"],
                                  params["beta"], cout=channel_out, out=out_flag)
        jax.block_until_ready(y)
        ho = 16 if out_flag else 15
        assert y.shape == (2, channel_out, ho, ho), y.shape
        assert bool(jnp.all(jnp.isfinite(y)))
        assert bool(jnp.all(y >= 0.0))

        y_ref = _reference(x, params["w_ct"], out=out_flag)
        max_err = float(jnp.max(jnp.abs(y - y_ref)))
        mean_err = float(jnp.mean(jnp.abs(y - y_ref)))
        # bf16 matmul operands (f32 accumulation) vs f32 HIGHEST reference.
        assert max_err < 5e-2 and mean_err < 5e-3, (out_flag, max_err, mean_err)

    print("KERNEL_OK")
</pallas_src>

<mosaic_0001>
module attributes {stable_mosaic.version = 11 : i64} {
  func.func @_convt_stats_kernel(%arg0: i32, %arg1: memref<1x9x9x32xbf16, #tpu.memory_space<vmem>>, %arg2: memref<128x512xbf16, #tpu.memory_space<vmem>>, %arg3: memref<1x2x128xf32, #tpu.memory_space<vmem>>) attributes {dimension_semantics = [#tpu.dimension_semantics<parallel>], iteration_bounds = array<i64: 2>, scalar_prefetch = 0 : i64, scratch_operands = 0 : i64, tpu.core_type = #tpu.core_type<tc>, window_params = [{transform_indices = @transform_0, window_bounds = array<i64: 1, 9, 9, 32>}, {pipeline_mode = #tpu.pipeline_mode<synchronous>, transform_indices = @transform_1, window_bounds = array<i64: 128, 512>}, {transform_indices = @transform_2, window_bounds = array<i64: 1, 2, 128>}]} {
    %c0 = arith.constant 0 : index
    %c0_0 = arith.constant 0 : index
    %c0_1 = arith.constant 0 : index
    %c0_2 = arith.constant 0 : index
    %0 = vector.load %arg1[%c0, %c0_0, %c0_1, %c0_2] : memref<1x9x9x32xbf16, #tpu.memory_space<vmem>>, vector<1x8x8x32xbf16>
    %1 = vector.shape_cast %0 : vector<1x8x8x32xbf16> to vector<8x8x32xbf16>
    %2 = vector.shape_cast %1 : vector<8x8x32xbf16> to vector<64x32xbf16>
    %c0_3 = arith.constant 0 : index
    %c0_4 = arith.constant 0 : index
    %c1 = arith.constant 1 : index
    %c0_5 = arith.constant 0 : index
    %3 = vector.load %arg1[%c0_3, %c0_4, %c1, %c0_5] : memref<1x9x9x32xbf16, #tpu.memory_space<vmem>>, vector<1x8x8x32xbf16>
    %4 = vector.shape_cast %3 : vector<1x8x8x32xbf16> to vector<8x8x32xbf16>
    %5 = vector.shape_cast %4 : vector<8x8x32xbf16> to vector<64x32xbf16>
    %c0_6 = arith.constant 0 : index
    %c1_7 = arith.constant 1 : index
    %c0_8 = arith.constant 0 : index
    %c0_9 = arith.constant 0 : index
    %6 = vector.load %arg1[%c0_6, %c1_7, %c0_8, %c0_9] : memref<1x9x9x32xbf16, #tpu.memory_space<vmem>>, vector<1x8x8x32xbf16>
    %7 = vector.shape_cast %6 : vector<1x8x8x32xbf16> to vector<8x8x32xbf16>
    %8 = vector.shape_cast %7 : vector<8x8x32xbf16> to vector<64x32xbf16>
    %c0_10 = arith.constant 0 : index
    %c1_11 = arith.constant 1 : index
    %c1_12 = arith.constant 1 : index
    %c0_13 = arith.constant 0 : index
    %9 = vector.load %arg1[%c0_10, %c1_11, %c1_12, %c0_13] : memref<1x9x9x32xbf16, #tpu.memory_space<vmem>>, vector<1x8x8x32xbf16>
    %10 = vector.shape_cast %9 : vector<1x8x8x32xbf16> to vector<8x8x32xbf16>
    %11 = vector.shape_cast %10 : vector<8x8x32xbf16> to vector<64x32xbf16>
    %12 = tpu.concatenate %2, %5, %8, %11 in 1 : vector<64x32xbf16>, vector<64x32xbf16>, vector<64x32xbf16>, vector<64x32xbf16> -> vector<64x128xbf16>
    %c0_14 = arith.constant 0 : index
    %c0_15 = arith.constant 0 : index
    %13 = vector.load %arg2[%c0_14, %c0_15] : memref<128x512xbf16, #tpu.memory_space<vmem>>, vector<128x512xbf16>
    %cst = arith.constant dense<0.000000e+00> : vector<64x512xf32>
    %14 = tpu.matmul %12, %13, %cst {dimension_numbers = #tpu.dot_dimension_numbers<[1], [0], [0], [1], [0, 0, 1, 1], [], []>} : vector<64x128xbf16>, vector<128x512xbf16>, vector<64x512xf32> -> vector<64x512xf32>
    %cst_16 = arith.constant dense<0.000000e+00> : vector<512xf32>
    %15 = vector.multi_reduction <add>, %14, %cst_16 [0] : vector<64x512xf32> to vector<512xf32>
    %16 = vector.shape_cast %15 : vector<512xf32> to vector<1x512xf32>
    %17 = arith.mulf %14, %14 : vector<64x512xf32>
    %cst_17 = arith.constant dense<0.000000e+00> : vector<512xf32>
    %18 = vector.multi_reduction <add>, %17, %cst_17 [0] : vector<64x512xf32> to vector<512xf32>
    %19 = vector.shape_cast %18 : vector<512xf32> to vector<1x512xf32>
    %20 = vector.extract_strided_slice %16 {offsets = [0, 0], sizes = [1, 128], strides = [1, 1]} : vector<1x512xf32> to vector<1x128xf32>
    %21 = vector.extract_strided_slice %16 {offsets = [0, 128], sizes = [1, 128], strides = [1, 1]} : vector<1x512xf32> to vector<1x128xf32>
    %22 = arith.addf %20, %21 : vector<1x128xf32>
    %23 = vector.extract_strided_slice %16 {offsets = [0, 256], sizes = [1, 128], strides = [1, 1]} : vector<1x512xf32> to vector<1x128xf32>
    %24 = arith.addf %22, %23 : vector<1x128xf32>
    %25 = vector.extract_strided_slice %16 {offsets = [0, 384], sizes = [1, 128], strides = [1, 1]} : vector<1x512xf32> to vector<1x128xf32>
    %26 = arith.addf %24, %25 : vector<1x128xf32>
    %27 = vector.extract_strided_slice %19 {offsets = [0, 0], sizes = [1, 128], strides = [1, 1]} : vector<1x512xf32> to vector<1x128xf32>
    %28 = vector.extract_strided_slice %19 {offsets = [0, 128], sizes = [1, 128], strides = [1, 1]} : vector<1x512xf32> to vector<1x128xf32>
    %29 = arith.addf %27, %28 : vector<1x128xf32>
    %30 = vector.extract_strided_slice %19 {offsets = [0, 256], sizes = [1, 128], strides = [1, 1]} : vector<1x512xf32> to vector<1x128xf32>
    %31 = arith.addf %29, %30 : vector<1x128xf32>
    %32 = vector.extract_strided_slice %19 {offsets = [0, 384], sizes = [1, 128], strides = [1, 1]} : vector<1x512xf32> to vector<1x128xf32>
    %33 = arith.addf %31, %32 : vector<1x128xf32>
    %34 = tpu.concatenate %26, %33 in 0 : vector<1x128xf32>, vector<1x128xf32> -> vector<2x128xf32>
    %c0_18 = arith.constant 0 : index
    %c0_19 = arith.constant 0 : index
    %c0_20 = arith.constant 0 : index
    %35 = vector.load %arg3[%c0_18, %c0_19, %c0_20] : memref<1x2x128xf32, #tpu.memory_space<vmem>>, vector<1x2x128xf32>
    %36 = vector.shape_cast %35 : vector<1x2x128xf32> to vector<2x128xf32>
    %37 = vector.shape_cast %34 : vector<2x128xf32> to vector<1x2x128xf32>
    tpu.vector_store %arg3[%c0_18, %c0_19, %c0_20], %37 {strides = array<i32>} : memref<1x2x128xf32, #tpu.memory_space<vmem>>, vector<1x2x128xf32>,
    return
  }
  func.func @transform_0(%arg0: i32) -> (i32, i32, i32, i32) {
    %c0_i32 = arith.constant 0 : i32
    %c0_i32_0 = arith.constant 0 : i32
    %c0_i32_1 = arith.constant 0 : i32
    %c0_i32_2 = arith.constant 0 : i32
    return %arg0, %c0_i32, %c0_i32_0, %c0_i32_1 : i32, i32, i32, i32
  }
  func.func @transform_1(%arg0: i32) -> (i32, i32) {
    %c0_i32 = arith.constant 0 : i32
    %c0_i32_0 = arith.constant 0 : i32
    %c0_i32_1 = arith.constant 0 : i32
    return %c0_i32, %c0_i32_0 : i32, i32
  }
  func.func @transform_2(%arg0: i32) -> (i32, i32, i32) {
    %c0_i32 = arith.constant 0 : i32
    %c0_i32_0 = arith.constant 0 : i32
    %c0_i32_1 = arith.constant 0 : i32
    return %arg0, %c0_i32, %c0_i32_0 : i32, i32, i32
  }
}

module attributes {stable_mosaic.version = 11 : i64} {
  func.func @_convt_apply_kernel(%arg0: i32, %arg1: memref<1x9x9x32xbf16, #tpu.memory_space<vmem>>, %arg2: memref<128x512xbf16, #tpu.memory_space<vmem>>, %arg3: memref<1x512xf32, #tpu.memory_space<vmem>>, %arg4: memref<1x512xf32, #tpu.memory_space<vmem>>, %arg5: memref<1x64x512xf32, #tpu.memory_space<vmem>>) attributes {dimension_semantics = [#tpu.dimension_semantics<parallel>], iteration_bounds = array<i64: 2>, scalar_prefetch = 0 : i64, scratch_operands = 0 : i64, tpu.core_type = #tpu.core_type<tc>, window_params = [{transform_indices = @transform_0, window_bounds = array<i64: 1, 9, 9, 32>}, {pipeline_mode = #tpu.pipeline_mode<synchronous>, transform_indices = @transform_1, window_bounds = array<i64: 128, 512>}, {pipeline_mode = #tpu.pipeline_mode<synchronous>, transform_indices = @transform_2, window_bounds = array<i64: 1, 512>}, {pipeline_mode = #tpu.pipeline_mode<synchronous>, transform_indices = @transform_3, window_bounds = array<i64: 1, 512>}, {transform_indices = @transform_4, window_bounds = array<i64: 1, 64, 512>}]} {
    %c0 = arith.constant 0 : index
    %c0_0 = arith.constant 0 : index
    %c0_1 = arith.constant 0 : index
    %c0_2 = arith.constant 0 : index
    %0 = vector.load %arg1[%c0, %c0_0, %c0_1, %c0_2] : memref<1x9x9x32xbf16, #tpu.memory_space<vmem>>, vector<1x8x8x32xbf16>
    %1 = vector.shape_cast %0 : vector<1x8x8x32xbf16> to vector<8x8x32xbf16>
    %2 = vector.shape_cast %1 : vector<8x8x32xbf16> to vector<64x32xbf16>
    %c0_3 = arith.constant 0 : index
    %c0_4 = arith.constant 0 : index
    %c1 = arith.constant 1 : index
    %c0_5 = arith.constant 0 : index
    %3 = vector.load %arg1[%c0_3, %c0_4, %c1, %c0_5] : memref<1x9x9x32xbf16, #tpu.memory_space<vmem>>, vector<1x8x8x32xbf16>
    %4 = vector.shape_cast %3 : vector<1x8x8x32xbf16> to vector<8x8x32xbf16>
    %5 = vector.shape_cast %4 : vector<8x8x32xbf16> to vector<64x32xbf16>
    %c0_6 = arith.constant 0 : index
    %c1_7 = arith.constant 1 : index
    %c0_8 = arith.constant 0 : index
    %c0_9 = arith.constant 0 : index
    %6 = vector.load %arg1[%c0_6, %c1_7, %c0_8, %c0_9] : memref<1x9x9x32xbf16, #tpu.memory_space<vmem>>, vector<1x8x8x32xbf16>
    %7 = vector.shape_cast %6 : vector<1x8x8x32xbf16> to vector<8x8x32xbf16>
    %8 = vector.shape_cast %7 : vector<8x8x32xbf16> to vector<64x32xbf16>
    %c0_10 = arith.constant 0 : index
    %c1_11 = arith.constant 1 : index
    %c1_12 = arith.constant 1 : index
    %c0_13 = arith.constant 0 : index
    %9 = vector.load %arg1[%c0_10, %c1_11, %c1_12, %c0_13] : memref<1x9x9x32xbf16, #tpu.memory_space<vmem>>, vector<1x8x8x32xbf16>
    %10 = vector.shape_cast %9 : vector<1x8x8x32xbf16> to vector<8x8x32xbf16>
    %11 = vector.shape_cast %10 : vector<8x8x32xbf16> to vector<64x32xbf16>
    %12 = tpu.concatenate %2, %5, %8, %11 in 1 : vector<64x32xbf16>, vector<64x32xbf16>, vector<64x32xbf16>, vector<64x32xbf16> -> vector<64x128xbf16>
    %c0_14 = arith.constant 0 : index
    %c0_15 = arith.constant 0 : index
    %13 = vector.load %arg2[%c0_14, %c0_15] : memref<128x512xbf16, #tpu.memory_space<vmem>>, vector<128x512xbf16>
    %cst = arith.constant dense<0.000000e+00> : vector<64x512xf32>
    %14 = tpu.matmul %12, %13, %cst {dimension_numbers = #tpu.dot_dimension_numbers<[1], [0], [0], [1], [0, 0, 1, 1], [], []>} : vector<64x128xbf16>, vector<128x512xbf16>, vector<64x512xf32> -> vector<64x512xf32>
    %c0_16 = arith.constant 0 : index
    %c0_17 = arith.constant 0 : index
    %15 = vector.load %arg3[%c0_16, %c0_17] : memref<1x512xf32, #tpu.memory_space<vmem>>, vector<1x512xf32>
    %16 = vector.broadcast %15 : vector<1x512xf32> to vector<64x512xf32>
    %17 = arith.mulf %14, %16 : vector<64x512xf32>
    %c0_18 = arith.constant 0 : index
    %c0_19 = arith.constant 0 : index
    %18 = vector.load %arg4[%c0_18, %c0_19] : memref<1x512xf32, #tpu.memory_space<vmem>>, vector<1x512xf32>
    %19 = vector.broadcast %18 : vector<1x512xf32> to vector<64x512xf32>
    %20 = arith.addf %17, %19 : vector<64x512xf32>
    %cst_20 = arith.constant 0.000000e+00 : f32
    %21 = vector.broadcast %cst_20 : f32 to vector<64x512xf32>
    %22 = arith.maximumf %20, %21 : vector<64x512xf32>
    %c0_21 = arith.constant 0 : index
    %c0_22 = arith.constant 0 : index
    %c0_23 = arith.constant 0 : index
    %23 = vector.load %arg5[%c0_21, %c0_22, %c0_23] : memref<1x64x512xf32, #tpu.memory_space<vmem>>, vector<1x64x512xf32>
    %24 = vector.shape_cast %23 : vector<1x64x512xf32> to vector<64x512xf32>
    %25 = vector.shape_cast %22 : vector<64x512xf32> to vector<1x64x512xf32>
    tpu.vector_store %arg5[%c0_21, %c0_22, %c0_23], %25 {strides = array<i32>} : memref<1x64x512xf32, #tpu.memory_space<vmem>>, vector<1x64x512xf32>,
    return
  }
  func.func @transform_0(%arg0: i32) -> (i32, i32, i32, i32) {
    %c0_i32 = arith.constant 0 : i32
    %c0_i32_0 = arith.constant 0 : i32
    %c0_i32_1 = arith.constant 0 : i32
    %c0_i32_2 = arith.constant 0 : i32
    return %arg0, %c0_i32, %c0_i32_0, %c0_i32_1 : i32, i32, i32, i32
  }
  func.func @transform_1(%arg0: i32) -> (i32, i32) {
    %c0_i32 = arith.constant 0 : i32
    %c0_i32_0 = arith.constant 0 : i32
    %c0_i32_1 = arith.constant 0 : i32
    return %c0_i32, %c0_i32_0 : i32, i32
  }
  func.func @transform_2(%arg0: i32) -> (i32, i32) {
    %c0_i32 = arith.constant 0 : i32
    %c0_i32_0 = arith.constant 0 : i32
    %c0_i32_1 = arith.constant 0 : i32
    return %c0_i32, %c0_i32_0 : i32, i32
  }
  func.func @transform_3(%arg0: i32) -> (i32, i32) {
    %c0_i32 = arith.constant 0 : i32
    %c0_i32_0 = arith.constant 0 : i32
    %c0_i32_1 = arith.constant 0 : i32
    return %c0_i32, %c0_i32_0 : i32, i32
  }
  func.func @transform_4(%arg0: i32) -> (i32, i32, i32) {
    %c0_i32 = arith.constant 0 : i32
    %c0_i32_0 = arith.constant 0 : i32
    %c0_i32_1 = arith.constant 0 : i32
    return %arg0, %c0_i32, %c0_i32_0 : i32, i32, i32
  }
}

</mosaic_0001>

<llo_original>
// kernel: tile.18
$region0: #{tile.18}
  #allocation0 [shape = 's32[1]{0}', space=sflag, size = 0x4, scoped, tag = 'scoped memory for tile.18']
  %s0 = inlined_call_operand.vmem [shape: f32[128], index: 0, kind: input, shape index: {}]
  %s1 = inlined_call_operand.vmem [shape: f32[4,128], index: 1, kind: output, shape index: {}]
  // Predicated region
  $region2: #{tile.18} parent=0 // pred_check
    _
  $region3: #{tile.18} parent=0 // pred_check_branch
    %3 = sbr.rel (0) target = $region5
  $region4: #{tile.18} parent=0 // pred_region
    _
  $region5: #{tile.18} parent=0 // pred_fallthru
    _
  %v4 = vld [vmem:[%s0] ss:$0 sm:$0xff]
  %5 = vst [vmem:[%s1] sm:$0xf] %v4

// kernel: decoder_block_forward.2
$region0: #{decoder_block_forward.2}
  #allocation0 [shape = 'u32[]', space=smem, size = 0x4, offset = 0x4, fixed_abs, tag = 'smem constant byte address 0x4 - core index']
  #allocation1 [shape = 'u32[144,128]{1,0:T(1,128)}', space=vmem, size = 0x12000, scoped, tag = 'internal scratch']
  %s0 = inlined_call_operand.vmem [shape: bf16[2,9,9,32], index: 0, kind: input, shape index: {}]
  %s1 = inlined_call_operand.vmem [shape: bf16[128,512], index: 1, kind: input, shape index: {}]
  %s2 = inlined_call_operand.vmem [shape: f32[2,2,128], index: 2, kind: output, shape index: {}]
  %s3 = sld [smem:[#allocation0]]
  $region41: #{decoder_block_forward.2} parent=0
    _
  %s5 = ssub.s32 1, %s3
  %s6 = scalar_select 0, %s5, %s3
  loop: start=0, step=1, limit=4
  $region2: #{decoder_block_forward.2} parent=0 // loop_pre_header
    _
  $region3: #{decoder_block_forward.2} parent=0 // loop_header
    %s8 = sphi 0, %s12
    %p9 = scmp.ge.s32.totalorder %s8, 4
    %s18 = sphi 0, %s20
    %s21 = sphi 0, %s18
    %s22 = sphi 0, %s21
    %s38 = sphi 0, %s22
    %s42 = sphi 0, %s42
    %s44 = sphi 0, %s42
    %s45 = sphi 0, %s44
    %s59 = sphi 0, %s45
    %s65 = sphi 0, %s67
    %s68 = sphi 0, %s65
    %s69 = sphi 0, %s68
    %s85 = sphi 0, %s69
  $region4: #{decoder_block_forward.2} parent=0 // loop_header_branch
    %11 = sbr.rel (%p9) target = $region8
  $region5: #{decoder_block_forward.2} parent=0 // loop_body
    %s13 = ssub.s32 %s8, 1
    %s14 = ssub.s32 %s8, 2
    %s15 = sadd.s32 %s8, 1
    %s16 = ssub.s32 %s8, %s15
    %p17 = scmp.eq.s32.totalorder %s16, 0
    %s19 = sadd.s32 %s18, 1
    %s20 = scalar_select %p17, %s18, %s19
    %p23 = pneg %p17
    %p24 = scmp.eq.s32.totalorder %s8, 1
    %p25 = por %p23, %p24
    %p26 = scmp.ne.s32.totalorder %s18, %s21
    %p27 = scmp.eq.s32.totalorder %s8, 0
    %p28 = por %p26, %p27
    %p29 = scmp.ne.s32.totalorder %s18, %s21
    %p30 = scmp.eq.s32.totalorder %s13, 1
    %p31 = por %p29, %p30
    %p32 = scmp.ne.s32.totalorder %s21, %s22
    %p33 = scmp.eq.s32.totalorder %s13, 0
    %p34 = por %p32, %p33
    %p35 = scmp.ne.s32.totalorder %s21, %s22
    %p36 = scmp.eq.s32.totalorder %s14, 1
    %p37 = por %p35, %p36
    %p39 = scmp.ne.s32.totalorder %s22, %s38
    %p40 = scmp.eq.s32.totalorder %s14, 0
    %p41 = por %p39, %p40
    %s43 = sadd.s32 %s42, 1
    %p46 = scmp.eq.s32.totalorder %s8, 1
    %p47 = scmp.ne.s32.totalorder %s42, %s44
    %p48 = scmp.eq.s32.totalorder %s8, 0
    %p49 = por %p47, %p48
    %p50 = scmp.ne.s32.totalorder %s42, %s44
    %p51 = scmp.eq.s32.totalorder %s13, 1
    %p52 = por %p50, %p51
    %p53 = scmp.ne.s32.totalorder %s44, %s45
    %p54 = scmp.eq.s32.totalorder %s13, 0
    %p55 = por %p53, %p54
    %p56 = scmp.ne.s32.totalorder %s44, %s45
    %p57 = scmp.eq.s32.totalorder %s14, 1
    %p58 = por %p56, %p57
    %p60 = scmp.ne.s32.totalorder %s45, %s59
    %p61 = scmp.eq.s32.totalorder %s14, 0
    %p62 = por %p60, %p61
    %s63 = ssub.s32 %s8, %s15
    %p64 = scmp.eq.s32.totalorder %s63, 0
    %s66 = sadd.s32 %s65, 1
    %s67 = scalar_select %p64, %s65, %s66
    %p70 = pneg %p64
    %p71 = scmp.eq.s32.totalorder %s8, 1
    %p72 = por %p70, %p71
    %p73 = scmp.ne.s32.totalorder %s65, %s68
    %p74 = scmp.eq.s32.totalorder %s8, 0
    %p75 = por %p73, %p74
    %p76 = scmp.ne.s32.totalorder %s65, %s68
    %p77 = scmp.eq.s32.totalorder %s13, 1
    %p78 = por %p76, %p77
    %p79 = scmp.ne.s32.totalorder %s68, %s69
    %p80 = scmp.eq.s32.totalorder %s13, 0
    %p81 = por %p79, %p80
    %p82 = scmp.ne.s32.totalorder %s68, %s69
    %p83 = scmp.eq.s32.totalorder %s14, 1
    %p84 = por %p82, %p83
    %p86 = scmp.ne.s32.totalorder %s69, %s85
    %p87 = scmp.eq.s32.totalorder %s14, 0
    %p88 = por %p86, %p87
    %p89 = scmp.le.s32.totalorder 1, %s8
    %p90 = scmp.lt.s32.totalorder %s8, 3
    %p91 = pnand %p89, %p90
    %p92 = pneg %p91
    // Predicated region
    $region9: #{decoder_block_forward.2} parent=5 // pred_check
      _
    $region10: #{decoder_block_forward.2} parent=5 // pred_check_branch
      %94 = sbr.rel (%p91) target = $region12
    $region11: #{decoder_block_forward.2} parent=5 // pred_region
      %s95 = ssub.s32 %s8, 1
      // Predicated region
      $region13: #{decoder_block_forward.2} parent=11 // pred_check
        %p96 = pneg %p55
      $region14: #{decoder_block_forward.2} parent=11 // pred_check_branch
        %98 = sbr.rel (%p96) target = $region16
      $region15: #{decoder_block_forward.2} parent=11 // pred_region
        _
      $region16: #{decoder_block_forward.2} parent=11 // pred_fallthru
        _
    $region12: #{decoder_block_forward.2} parent=5 // pred_fallthru
      _
    %p99 = scmp.lt.s32.totalorder %s8, 2
    // Predicated region
    $region17: #{decoder_block_forward.2} parent=5 // pred_check
      %p100 = pneg %p99
    $region18: #{decoder_block_forward.2} parent=5 // pred_check_branch
      %102 = sbr.rel (%p100) target = $region20
    $region19: #{decoder_block_forward.2} parent=5 // pred_region
      // Predicated region
      $region21: #{decoder_block_forward.2} parent=19 // pred_check
        %p103 = pneg %p28
      $region22: #{decoder_block_forward.2} parent=19 // pred_check_branch
        %105 = sbr.rel (%p103) target = $region24
      $region23: #{decoder_block_forward.2} parent=19 // pred_region
        %p106 = scmp.lt.s32.totalorder %s8, 1
        %s107 = scalar_select %p106, %s8, 1
        %s108 = smul.addr %s107, 18
        %s109 = smul.addr %s108, 4
        %s110 = scalar_lea.vmem %s0, %s109
      $region24: #{decoder_block_forward.2} parent=19 // pred_fallthru
        _
    $region20: #{decoder_block_forward.2} parent=5 // pred_fallthru
      _
    %p111 = scmp.le.s32.totalorder 1, %s8
    %p112 = scmp.lt.s32.totalorder %s8, 3
    %p113 = pnand %p111, %p112
    %p114 = pneg %p113
    // Predicated region
    $region25: #{decoder_block_forward.2} parent=5 // pred_check
      _
    $region26: #{decoder_block_forward.2} parent=5 // pred_check_branch
      %116 = sbr.rel (%p113) target = $region28
    $region27: #{decoder_block_forward.2} parent=5 // pred_region
      %s117 = ssub.s32 %s8, 1
      %p118 = scmp.lt.s32.totalorder %s13, 1
      %s119 = scalar_select %p118, %s13, 1
      %s120 = smul.addr %s119, 18
      %s121 = smul.addr %s120, 4
      %s122 = scalar_lea.vmem %s0, %s121
      %p123 = pneg %p34
      %p124 = pneg %p31
      %p125 = pneg %p55
      %p126 = pneg %p52
      %p127 = pneg %p81
      %p128 = pneg %p78
      %p129 = scmp.lt.s32.totalorder %s13, 1
      %s130 = scalar_select %p129, %s13, 1
      %s131 = smul.addr %s130, 2
      %s132 = scalar_lea.vmem %s2, %s131
      %p133 = scmp.lt.s32.totalorder %s13, 1
      %s134 = scalar_select %p133, %s13, 1
      %s135 = smul.addr %s134, 18
      %s136 = smul.addr %s135, 4
      %s137 = scalar_lea.vmem %s0, %s136
      %p138 = scmp.lt.s32.totalorder %s13, 1
      %s139 = scalar_select %p138, %s13, 1
      %s140 = smul.addr %s139, 2
      %s141 = scalar_lea.vmem %s2, %s140
      %v143 = vld [vmem:[%s137] sm:$0xf]
      %v144 = vld [vmem:[%s137 + $0x8] sm:$0xf]
      %v145 = vld [vmem:[%s137 + $0x10] sm:$0xf]
      %v146 = vld [vmem:[%s137 + $0x18] sm:$0xf]
      %v147 = vld [vmem:[%s137 + $0x20] sm:$0xf]
      %v148 = vld [vmem:[%s137 + $0x28] sm:$0xf]
      %v149 = vld [vmem:[%s137 + $0x30] sm:$0xf]
      %v150 = vld [vmem:[%s137 + $0x38] sm:$0xf]
      %v151 = vld [vmem:[%s137 + $0x4] sm:$0x1]
      %v152 = vld [vmem:[%s137 + $0xc] sm:$0x1]
      %v153 = vld [vmem:[%s137 + $0x14] sm:$0x1]
      %v154 = vld [vmem:[%s137 + $0x1c] sm:$0x1]
      %v155 = vld [vmem:[%s137 + $0x24] sm:$0x1]
      %v156 = vld [vmem:[%s137 + $0x2c] sm:$0x1]
      %v157 = vld [vmem:[%s137 + $0x34] sm:$0x1]
      %v158 = vld [vmem:[%s137 + $0x3c] sm:$0x1]
      %vm159 = vsmask.f32 3328
      %vm160 = vsmask.f32 7440
      %vm161 = vmor %vm159, %vm160
      %v163 = vshrl.u32 %v143, 16
      %v165 = vrot.slane %v163, 4
      %v166 = vshll.u32 %v143, 16
      %v168 = vrot.slane %v166, 5
      %v169 = vor.u32 %v165, %v168
      %v170 = vrot.slane %v169, 4
      %v172 = vshll.u32 %v151, 16
      %v174 = vrot.slane %v172, 5
      %v175 = vsel %vm161, %v170, %v174
      %v177 = vshrl.u32 %v144, 16
      %v179 = vrot.slane %v177, 4
      %v180 = vshll.u32 %v144, 16
      %v182 = vrot.slane %v180, 5
      %v183 = vor.u32 %v179, %v182
      %v184 = vrot.slane %v183, 4
      %v186 = vshll.u32 %v152, 16
      %v188 = vrot.slane %v186, 5
      %v189 = vsel %vm161, %v184, %v188
      %v191 = vshrl.u32 %v145, 16
      %v193 = vrot.slane %v191, 4
      %v194 = vshll.u32 %v145, 16
      %v196 = vrot.slane %v194, 5
      %v197 = vor.u32 %v193, %v196
      %v198 = vrot.slane %v197, 4
      %v200 = vshll.u32 %v153, 16
      %v202 = vrot.slane %v200, 5
      %v203 = vsel %vm161, %v198, %v202
      %v205 = vshrl.u32 %v146, 16
      %v207 = vrot.slane %v205, 4
      %v208 = vshll.u32 %v146, 16
      %v210 = vrot.slane %v208, 5
      %v211 = vor.u32 %v207, %v210
      %v212 = vrot.slane %v211, 4
      %v214 = vshll.u32 %v154, 16
      %v216 = vrot.slane %v214, 5
      %v217 = vsel %vm161, %v212, %v216
      %v219 = vshrl.u32 %v147, 16
      %v221 = vrot.slane %v219, 4
      %v222 = vshll.u32 %v147, 16
      %v224 = vrot.slane %v222, 5
      %v225 = vor.u32 %v221, %v224
      %v226 = vrot.slane %v225, 4
      %v228 = vshll.u32 %v155, 16
      %v230 = vrot.slane %v228, 5
      %v231 = vsel %vm161, %v226, %v230
      %v233 = vshrl.u32 %v148, 16
      %v235 = vrot.slane %v233, 4
      %v236 = vshll.u32 %v148, 16
      %v238 = vrot.slane %v236, 5
      %v239 = vor.u32 %v235, %v238
      %v240 = vrot.slane %v239, 4
      %v242 = vshll.u32 %v156, 16
      %v244 = vrot.slane %v242, 5
      %v245 = vsel %vm161, %v240, %v244
      %v247 = vshrl.u32 %v149, 16
      %v249 = vrot.slane %v247, 4
      %v250 = vshll.u32 %v149, 16
      %v252 = vrot.slane %v250, 5
      %v253 = vor.u32 %v249, %v252
      %v254 = vrot.slane %v253, 4
      %v256 = vshll.u32 %v157, 16
      %v258 = vrot.slane %v256, 5
      %v259 = vsel %vm161, %v254, %v258
      %v261 = vshrl.u32 %v150, 16
      %v263 = vrot.slane %v261, 4
      %v264 = vshll.u32 %v150, 16
      %v266 = vrot.slane %v264, 5
      %v267 = vor.u32 %v263, %v266
      %v268 = vrot.slane %v267, 4
      %v270 = vshll.u32 %v158, 16
      %v272 = vrot.slane %v270, 5
      %v273 = vsel %vm161, %v268, %v272
      %s274 = scalar_lea.vmem %s137, 8
      %v275 = vld [vmem:[%s274] sm:$0xf]
      %v276 = vld [vmem:[%s274 + $0x8] sm:$0xf]
      %v277 = vld [vmem:[%s274 + $0x10] sm:$0xf]
      %v278 = vld [vmem:[%s274 + $0x18] sm:$0xf]
      %v279 = vld [vmem:[%s274 + $0x20] sm:$0xf]
      %v280 = vld [vmem:[%s274 + $0x28] sm:$0xf]
      %v281 = vld [vmem:[%s274 + $0x30] sm:$0xf]
      %v282 = vld [vmem:[%s274 + $0x38] sm:$0xf]
      %v283 = vld [vmem:[%s274 + $0x4] sm:$0x1]
      %v284 = vld [vmem:[%s274 + $0xc] sm:$0x1]
      %v285 = vld [vmem:[%s274 + $0x14] sm:$0x1]
      %v286 = vld [vmem:[%s274 + $0x1c] sm:$0x1]
      %v287 = vld [vmem:[%s274 + $0x24] sm:$0x1]
      %v288 = vld [vmem:[%s274 + $0x2c] sm:$0x1]
      %v289 = vld [vmem:[%s274 + $0x34] sm:$0x1]
      %v290 = vld [vmem:[%s274 + $0x3c] sm:$0x1]
      %v292 = vshrl.u32 %v275, 16
      %v294 = vrot.slane %v292, 4
      %v295 = vshll.u32 %v275, 16
      %v297 = vrot.slane %v295, 5
      %v298 = vor.u32 %v294, %v297
      %v299 = vrot.slane %v298, 4
      %v301 = vshll.u32 %v283, 16
      %v303 = vrot.slane %v301, 5
      %v304 = vsel %vm161, %v299, %v303
      %v306 = vshrl.u32 %v276, 16
      %v308 = vrot.slane %v306, 4
      %v309 = vshll.u32 %v276, 16
      %v311 = vrot.slane %v309, 5
      %v312 = vor.u32 %v308, %v311
      %v313 = vrot.slane %v312, 4
      %v315 = vshll.u32 %v284, 16
      %v317 = vrot.slane %v315, 5
      %v318 = vsel %vm161, %v313, %v317
      %v320 = vshrl.u32 %v277, 16
      %v322 = vrot.slane %v320, 4
      %v323 = vshll.u32 %v277, 16
      %v325 = vrot.slane %v323, 5
      %v326 = vor.u32 %v322, %v325
      %v327 = vrot.slane %v326, 4
      %v329 = vshll.u32 %v285, 16
      %v331 = vrot.slane %v329, 5
      %v332 = vsel %vm161, %v327, %v331
      %v334 = vshrl.u32 %v278, 16
      %v336 = vrot.slane %v334, 4
      %v337 = vshll.u32 %v278, 16
      %v339 = vrot.slane %v337, 5
      %v340 = vor.u32 %v336, %v339
      %v341 = vrot.slane %v340, 4
      %v343 = vshll.u32 %v286, 16
      %v345 = vrot.slane %v343, 5
      %v346 = vsel %vm161, %v341, %v345
      %v348 = vshrl.u32 %v279, 16
      %v350 = vrot.slane %v348, 4
      %v351 = vshll.u32 %v279, 16
      %v353 = vrot.slane %v351, 5
      %v354 = vor.u32 %v350, %v353
      %v355 = vrot.slane %v354, 4
      %v357 = vshll.u32 %v287, 16
      %v359 = vrot.slane %v357, 5
      %v360 = vsel %vm161, %v355, %v359
      %v362 = vshrl.u32 %v280, 16
      %v364 = vrot.slane %v362, 4
      %v365 = vshll.u32 %v280, 16
      %v367 = vrot.slane %v365, 5
      %v368 = vor.u32 %v364, %v367
      %v369 = vrot.slane %v368, 4
      %v371 = vshll.u32 %v288, 16
      %v373 = vrot.slane %v371, 5
      %v374 = vsel %vm161, %v369, %v373
      %v376 = vshrl.u32 %v281, 16
      %v378 = vrot.slane %v376, 4
      %v379 = vshll.u32 %v281, 16
      %v381 = vrot.slane %v379, 5
      %v382 = vor.u32 %v378, %v381
      %v383 = vrot.slane %v382, 4
      %v385 = vshll.u32 %v289, 16
      %v387 = vrot.slane %v385, 5
      %v388 = vsel %vm161, %v383, %v387
      %v390 = vshrl.u32 %v282, 16
      %v392 = vrot.slane %v390, 4
      %v393 = vshll.u32 %v282, 16
      %v395 = vrot.slane %v393, 5
      %v396 = vor.u32 %v392, %v395
      %v397 = vrot.slane %v396, 4
      %v399 = vshll.u32 %v290, 16
      %v401 = vrot.slane %v399, 5
      %v402 = vsel %vm161, %v397, %v401
      %v411 = vunpack.c.l.b16 %v143
      %v412 = vunpack.c.l.b16 %v144
      %v413 = vunpack.c.l.b16 %v145
      %v414 = vunpack.c.l.b16 %v146
      %v415 = vunpack.c.l.b16 %v147
      %v416 = vunpack.c.l.b16 %v148
      %v417 = vunpack.c.l.b16 %v149
      %v418 = vunpack.c.l.b16 %v150
      %v419 = vpack.c.b16 %v412, %v411
      %v420 = vpack.c.b16 %v414, %v413
      %v421 = vpack.c.b16 %v416, %v415
      %v422 = vpack.c.b16 %v418, %v417
      %v423 = vunpack.c.l.b16 %v175
      %v424 = vunpack.c.l.b16 %v189
      %v425 = vunpack.c.l.b16 %v203
      %v426 = vunpack.c.l.b16 %v217
      %v427 = vunpack.c.l.b16 %v231
      %v428 = vunpack.c.l.b16 %v245
      %v429 = vunpack.c.l.b16 %v259
      %v430 = vunpack.c.l.b16 %v273
      %v431 = vpack.c.b16 %v424, %v423
      %v432 = vpack.c.b16 %v426, %v425
      %v433 = vpack.c.b16 %v428, %v427
      %v434 = vpack.c.b16 %v430, %v429
      %435 = vrot.lane.b32.xlu0 %v431, 32
      %v436 = vpop.permute.xlu0 %435
      %437 = vrot.lane.b32.xlu0 %v432, 32
      %v438 = vpop.permute.xlu0 %437
      %439 = vrot.lane.b32.xlu0 %v433, 32
      %v440 = vpop.permute.xlu0 %439
      %441 = vrot.lane.b32.xlu0 %v434, 32
      %v442 = vpop.permute.xlu0 %441
      %v451 = vunpack.c.l.b16 %v275
      %v452 = vunpack.c.l.b16 %v276
      %v453 = vunpack.c.l.b16 %v277
      %v454 = vunpack.c.l.b16 %v278
      %v455 = vunpack.c.l.b16 %v279
      %v456 = vunpack.c.l.b16 %v280
      %v457 = vunpack.c.l.b16 %v281
      %v458 = vunpack.c.l.b16 %v282
      %v459 = vpack.c.b16 %v452, %v451
      %v460 = vpack.c.b16 %v454, %v453
      %v461 = vpack.c.b16 %v456, %v455
      %v462 = vpack.c.b16 %v458, %v457
      %463 = vrot.lane.b32.xlu0 %v459, 64
      %v464 = vpop.permute.xlu0 %463
      %465 = vrot.lane.b32.xlu0 %v460, 64
      %v466 = vpop.permute.xlu0 %465
      %467 = vrot.lane.b32.xlu0 %v461, 64
      %v468 = vpop.permute.xlu0 %467
      %469 = vrot.lane.b32.xlu0 %v462, 64
      %v470 = vpop.permute.xlu0 %469
      %v471 = vunpack.c.l.b16 %v304
      %v472 = vunpack.c.l.b16 %v318
      %v473 = vunpack.c.l.b16 %v332
      %v474 = vunpack.c.l.b16 %v346
      %v475 = vunpack.c.l.b16 %v360
      %v476 = vunpack.c.l.b16 %v374
      %v477 = vunpack.c.l.b16 %v388
      %v478 = vunpack.c.l.b16 %v402
      %v479 = vpack.c.b16 %v472, %v471
      %v480 = vpack.c.b16 %v474, %v473
      %v481 = vpack.c.b16 %v476, %v475
      %v482 = vpack.c.b16 %v478, %v477
      %483 = vrot.lane.b32.xlu0 %v479, 96
      %v484 = vpop.permute.xlu0 %483
      %485 = vrot.lane.b32.xlu0 %v480, 96
      %v486 = vpop.permute.xlu0 %485
      %487 = vrot.lane.b32.xlu0 %v481, 96
      %v488 = vpop.permute.xlu0 %487
      %489 = vrot.lane.b32.xlu0 %v482, 96
      %v490 = vpop.permute.xlu0 %489
      %vm491 = vcmask 261120
      %v494 = vsel %vm491, %v419, %v436
      %v497 = vsel %vm491, %v420, %v438
      %v500 = vsel %vm491, %v421, %v440
      %v503 = vsel %vm491, %v422, %v442
      %vm504 = vcmask 523264
      %v506 = vsel %vm504, %v494, %v464
      %v508 = vsel %vm504, %v497, %v466
      %v510 = vsel %vm504, %v500, %v468
      %v512 = vsel %vm504, %v503, %v470
      %vm513 = vcmask 785408
      %v515 = vsel %vm513, %v506, %v484
      %v518 = vsel %vm513, %v508, %v486
      %v521 = vsel %vm513, %v510, %v488
      %v524 = vsel %vm513, %v512, %v490
      %v526 = vld [vmem:[%s1] sm:$0xff]
      %v527 = vld [vmem:[%s1 + $0x8] sm:$0xff]
      %v528 = vld [vmem:[%s1 + $0x10] sm:$0xff]
      %v529 = vld [vmem:[%s1 + $0x18] sm:$0xff]
      %v530 = vld [vmem:[%s1 + $0x20] sm:$0xff]
      %v531 = vld [vmem:[%s1 + $0x28] sm:$0xff]
      %v532 = vld [vmem:[%s1 + $0x30] sm:$0xff]
      %v533 = vld [vmem:[%s1 + $0x38] sm:$0xff]
      %v534 = vld [vmem:[%s1 + $0x40] sm:$0xff]
      %v535 = vld [vmem:[%s1 + $0x48] sm:$0xff]
      %v536 = vld [vmem:[%s1 + $0x50] sm:$0xff]
      %v537 = vld [vmem:[%s1 + $0x58] sm:$0xff]
      %v538 = vld [vmem:[%s1 + $0x60] sm:$0xff]
      %v539 = vld [vmem:[%s1 + $0x68] sm:$0xff]
      %v540 = vld [vmem:[%s1 + $0x70] sm:$0xff]
      %v541 = vld [vmem:[%s1 + $0x78] sm:$0xff]
      %v542 = vld [vmem:[%s1 + $0x80] sm:$0xff]
      %v543 = vld [vmem:[%s1 + $0x88] sm:$0xff]
      %v544 = vld [vmem:[%s1 + $0x90] sm:$0xff]
      %v545 = vld [vmem:[%s1 + $0x98] sm:$0xff]
      %v546 = vld [vmem:[%s1 + $0xa0] sm:$0xff]
      %v547 = vld [vmem:[%s1 + $0xa8] sm:$0xff]
      %v548 = vld [vmem:[%s1 + $0xb0] sm:$0xff]
      %v549 = vld [vmem:[%s1 + $0xb8] sm:$0xff]
      %v550 = vld [vmem:[%s1 + $0xc0] sm:$0xff]
      %v551 = vld [vmem:[%s1 + $0xc8] sm:$0xff]
      %v552 = vld [vmem:[%s1 + $0xd0] sm:$0xff]
      %v553 = vld [vmem:[%s1 + $0xd8] sm:$0xff]
      %v554 = vld [vmem:[%s1 + $0xe0] sm:$0xff]
      %v555 = vld [vmem:[%s1 + $0xe8] sm:$0xff]
      %v556 = vld [vmem:[%s1 + $0xf0] sm:$0xff]
      %v557 = vld [vmem:[%s1 + $0xf8] sm:$0xff]
      %v590 = vunpack.c.l.b16 %v526
      %v591 = vunpack.c.h.b16 %v526
      %v592 = vunpack.c.l.b16 %v527
      %v593 = vunpack.c.h.b16 %v527
      %v594 = vunpack.c.l.b16 %v528
      %v595 = vunpack.c.h.b16 %v528
      %v596 = vunpack.c.l.b16 %v529
      %v597 = vunpack.c.h.b16 %v529
      %v598 = vunpack.c.l.b16 %v530
      %v599 = vunpack.c.h.b16 %v530
      %v600 = vunpack.c.l.b16 %v531
      %v601 = vunpack.c.h.b16 %v531
      %v602 = vunpack.c.l.b16 %v532
      %v603 = vunpack.c.h.b16 %v532
      %v604 = vunpack.c.l.b16 %v533
      %v605 = vunpack.c.h.b16 %v533
      %v606 = vunpack.c.l.b16 %v534
      %v607 = vunpack.c.h.b16 %v534
      %v608 = vunpack.c.l.b16 %v535
      %v609 = vunpack.c.h.b16 %v535
      %v610 = vunpack.c.l.b16 %v536
      %v611 = vunpack.c.h.b16 %v536
      %v612 = vunpack.c.l.b16 %v537
      %v613 = vunpack.c.h.b16 %v537
      %v614 = vunpack.c.l.b16 %v538
      %v615 = vunpack.c.h.b16 %v538
      %v616 = vunpack.c.l.b16 %v539
      %v617 = vunpack.c.h.b16 %v539
      %v618 = vunpack.c.l.b16 %v540
      %v619 = vunpack.c.h.b16 %v540
      %v620 = vunpack.c.l.b16 %v541
      %v621 = vunpack.c.h.b16 %v541
      %v622 = vunpack.c.l.b16 %v542
      %v623 = vunpack.c.h.b16 %v542
      %v624 = vunpack.c.l.b16 %v543
      %v625 = vunpack.c.h.b16 %v543
      %v626 = vunpack.c.l.b16 %v544
      %v627 = vunpack.c.h.b16 %v544
      %v628 = vunpack.c.l.b16 %v545
      %v629 = vunpack.c.h.b16 %v545
      %v630 = vunpack.c.l.b16 %v546
      %v631 = vunpack.c.h.b16 %v546
      %v632 = vunpack.c.l.b16 %v547
      %v633 = vunpack.c.h.b16 %v547
      %v634 = vunpack.c.l.b16 %v548
      %v635 = vunpack.c.h.b16 %v548
      %v636 = vunpack.c.l.b16 %v549
      %v637 = vunpack.c.h.b16 %v549
      %v638 = vunpack.c.l.b16 %v550
      %v639 = vunpack.c.h.b16 %v550
      %v640 = vunpack.c.l.b16 %v551
      %v641 = vunpack.c.h.b16 %v551
      %v642 = vunpack.c.l.b16 %v552
      %v643 = vunpack.c.h.b16 %v552
      %v644 = vunpack.c.l.b16 %v553
      %v645 = vunpack.c.h.b16 %v553
      %v646 = vunpack.c.l.b16 %v554
      %v647 = vunpack.c.h.b16 %v554
      %v648 = vunpack.c.l.b16 %v555
      %v649 = vunpack.c.h.b16 %v555
      %v650 = vunpack.c.l.b16 %v556
      %v651 = vunpack.c.h.b16 %v556
      %v652 = vunpack.c.l.b16 %v557
      %v653 = vunpack.c.h.b16 %v557
      %v654 = vpack.c.b16 %v594, %v590
      %v655 = vpack.c.b16 %v595, %v591
      %v656 = vpack.c.b16 %v596, %v592
      %v657 = vpack.c.b16 %v597, %v593
      %v658 = vpack.c.b16 %v602, %v598
      %v659 = vpack.c.b16 %v603, %v599
      %v660 = vpack.c.b16 %v604, %v600
      %v661 = vpack.c.b16 %v605, %v601
      %v662 = vpack.c.b16 %v610, %v606
      %v663 = vpack.c.b16 %v611, %v607
      %v664 = vpack.c.b16 %v612, %v608
      %v665 = vpack.c.b16 %v613, %v609
      %v666 = vpack.c.b16 %v618, %v614
      %v667 = vpack.c.b16 %v619, %v615
      %v668 = vpack.c.b16 %v620, %v616
      %v669 = vpack.c.b16 %v621, %v617
      %v670 = vpack.c.b16 %v626, %v622
      %v671 = vpack.c.b16 %v627, %v623
      %v672 = vpack.c.b16 %v628, %v624
      %v673 = vpack.c.b16 %v629, %v625
      %v674 = vpack.c.b16 %v634, %v630
      %v675 = vpack.c.b16 %v635, %v631
      %v676 = vpack.c.b16 %v636, %v632
      %v677 = vpack.c.b16 %v637, %v633
      %v678 = vpack.c.b16 %v642, %v638
      %v679 = vpack.c.b16 %v643, %v639
      %v680 = vpack.c.b16 %v644, %v640
      %v681 = vpack.c.b16 %v645, %v641
      %v682 = vpack.c.b16 %v650, %v646
      %v683 = vpack.c.b16 %v651, %v647
      %v684 = vpack.c.b16 %v652, %v648
      %v685 = vpack.c.b16 %v653, %v649
      %718 = vmatprep.subr.bf16.mxu0 %v655
      %719 = vmatpush1.bf16.msra.mxu0 %v654
      %720 = vmatprep.subr.bf16.mxu0 %v659
      %721 = vmatpush1.bf16.msra.mxu0 %v658
      %722 = vmatprep.subr.bf16.mxu0 %v663
      %723 = vmatpush1.bf16.msra.mxu0 %v662
      %724 = vmatprep.subr.bf16.mxu0 %v667
      %725 = vmatpush1.bf16.msra.mxu0 %v666
      %726 = vmatprep.subr.bf16.mxu0 %v671
      %727 = vmatpush1.bf16.msra.mxu0 %v670
      %728 = vmatprep.subr.bf16.mxu0 %v675
      %729 = vmatpush1.bf16.msra.mxu0 %v674
      %730 = vmatprep.subr.bf16.mxu0 %v679
      %731 = vmatpush1.bf16.msra.mxu0 %v678
      %732 = vmatprep.subr.bf16.mxu0 %v683
      %733 = vmatpush1.bf16.msra.mxu0 %v682
      %734 = vmatprep.subr.bf16.mxu0 0
      %735 = vmatpush1.bf16.msra.mxu0 0
      %736 = vmatprep.subr.bf16.mxu0 0
      %737 = vmatpush1.bf16.msra.mxu0 0
      %738 = vmatprep.subr.bf16.mxu0 0
      %739 = vmatpush1.bf16.msra.mxu0 0
      %740 = vmatprep.subr.bf16.mxu0 0
      %741 = vmatpush1.bf16.msra.mxu0 0
      %742 = vmatprep.subr.bf16.mxu0 0
      %743 = vmatpush1.bf16.msra.mxu0 0
      %744 = vmatprep.subr.bf16.mxu0 0
      %745 = vmatpush1.bf16.msra.mxu0 0
      %746 = vmatprep.subr.bf16.mxu0 0
      %747 = vmatpush1.bf16.msra.mxu0 0
      %748 = vmatprep.subr.bf16.mxu0 0
      %749 = vmatpush1.bf16.msra.mxu0 0
      %750 = vmatprep.mubr.bf16.mxu0 0
      %751 = vmatmul.mubr.bf16.gmra.mrb[0].mxu0 %v515
      %v752 = vpop.f32.mrb[0].mxu0
      %v753 = vadd.f32 0.0, %v752
      %v754 = vpop.f32.mrb[0].mxu0
      %v755 = vadd.f32 0.0, %v754
      %v756 = vpop.f32.mrb[0].mxu0
      %v757 = vadd.f32 0.0, %v756
      %v758 = vpop.f32.mrb[0].mxu0
      %v759 = vadd.f32 0.0, %v758
      %760 = vmatprep.mubr.bf16.mxu0 0
      %761 = vmatmul.mubr.bf16.gmra.mrb[0].mxu0 %v518
      %v762 = vpop.f32.mrb[0].mxu0
      %v763 = vadd.f32 0.0, %v762
      %v764 = vpop.f32.mrb[0].mxu0
      %v765 = vadd.f32 0.0, %v764
      %v766 = vpop.f32.mrb[0].mxu0
      %v767 = vadd.f32 0.0, %v766
      %v768 = vpop.f32.mrb[0].mxu0
      %v769 = vadd.f32 0.0, %v768
      %770 = vmatprep.mubr.bf16.mxu0 0
      %771 = vmatmul.mubr.bf16.gmra.mrb[0].mxu0 %v521
      %v772 = vpop.f32.mrb[0].mxu0
      %v773 = vadd.f32 0.0, %v772
      %v774 = vpop.f32.mrb[0].mxu0
      %v775 = vadd.f32 0.0, %v774
      %v776 = vpop.f32.mrb[0].mxu0
      %v777 = vadd.f32 0.0, %v776
      %v778 = vpop.f32.mrb[0].mxu0
      %v779 = vadd.f32 0.0, %v778
      %780 = vmatprep.mubr.bf16.mxu0 0
      %781 = vmatmul.mubr.bf16.gmra.mrb[0].mxu0 %v524
      %v782 = vpop.f32.mrb[0].mxu0
      %v783 = vadd.f32 0.0, %v782
      %v784 = vpop.f32.mrb[0].mxu0
      %v785 = vadd.f32 0.0, %v784
      %v786 = vpop.f32.mrb[0].mxu0
      %v787 = vadd.f32 0.0, %v786
      %v788 = vpop.f32.mrb[0].mxu0
      %v789 = vadd.f32 0.0, %v788
      %790 = vdwg.mxu0
      %791 = vmatprep.subr.bf16.mxu0 %v657
      %792 = vmatpush1.bf16.msra.mxu0 %v656
      %793 = vmatprep.subr.bf16.mxu0 %v661
      %794 = vmatpush1.bf16.msra.mxu0 %v660
      %795 = vmatprep.subr.bf16.mxu0 %v665
      %796 = vmatpush1.bf16.msra.mxu0 %v664
      %797 = vmatprep.subr.bf16.mxu0 %v669
      %798 = vmatpush1.bf16.msra.mxu0 %v668
      %799 = vmatprep.subr.bf16.mxu0 %v673
      %800 = vmatpush1.bf16.msra.mxu0 %v672
      %801 = vmatprep.subr.bf16.mxu0 %v677
      %802 = vmatpush1.bf16.msra.mxu0 %v676
      %803 = vmatprep.subr.bf16.mxu0 %v681
      %804 = vmatpush1.bf16.msra.mxu0 %v680
      %805 = vmatprep.subr.bf16.mxu0 %v685
      %806 = vmatpush1.bf16.msra.mxu0 %v684
      %807 = vmatprep.subr.bf16.mxu0 0
      %808 = vmatpush1.bf16.msra.mxu0 0
      %809 = vmatprep.subr.bf16.mxu0 0
      %810 = vmatpush1.bf16.msra.mxu0 0
      %811 = vmatprep.subr.bf16.mxu0 0
      %812 = vmatpush1.bf16.msra.mxu0 0
      %813 = vmatprep.subr.bf16.mxu0 0
      %814 = vmatpush1.bf16.msra.mxu0 0
      %815 = vmatprep.subr.bf16.mxu0 0
      %816 = vmatpush1.bf16.msra.mxu0 0
      %817 = vmatprep.subr.bf16.mxu0 0
      %818 = vmatpush1.bf16.msra.mxu0 0
      %819 = vmatprep.subr.bf16.mxu0 0
      %820 = vmatpush1.bf16.msra.mxu0 0
      %821 = vmatprep.subr.bf16.mxu0 0
      %822 = vmatpush1.bf16.msra.mxu0 0
      %823 = vmatprep.mubr.bf16.mxu0 0
      %824 = vmatmul.mubr.bf16.gmra.mrb[0].mxu0 %v515
      %v825 = vpop.f32.mrb[0].mxu0
      %v826 = vadd.f32 0.0, %v825
      %v827 = vpop.f32.mrb[0].mxu0
      %v828 = vadd.f32 0.0, %v827
      %v829 = vpop.f32.mrb[0].mxu0
      %v830 = vadd.f32 0.0, %v829
      %v831 = vpop.f32.mrb[0].mxu0
      %v832 = vadd.f32 0.0, %v831
      %833 = vmatprep.mubr.bf16.mxu0 0
      %834 = vmatmul.mubr.bf16.gmra.mrb[0].mxu0 %v518
      %v835 = vpop.f32.mrb[0].mxu0
      %v836 = vadd.f32 0.0, %v835
      %v837 = vpop.f32.mrb[0].mxu0
      %v838 = vadd.f32 0.0, %v837
      %v839 = vpop.f32.mrb[0].mxu0
      %v840 = vadd.f32 0.0, %v839
      %v841 = vpop.f32.mrb[0].mxu0
      %v842 = vadd.f32 0.0, %v841
      %843 = vmatprep.mubr.bf16.mxu0 0
      %844 = vmatmul.mubr.bf16.gmra.mrb[0].mxu0 %v521
      %v845 = vpop.f32.mrb[0].mxu0
      %v846 = vadd.f32 0.0, %v845
      %v847 = vpop.f32.mrb[0].mxu0
      %v848 = vadd.f32 0.0, %v847
      %v849 = vpop.f32.mrb[0].mxu0
      %v850 = vadd.f32 0.0, %v849
      %v851 = vpop.f32.mrb[0].mxu0
      %v852 = vadd.f32 0.0, %v851
      %853 = vmatprep.mubr.bf16.mxu0 0
      %854 = vmatmul.mubr.bf16.gmra.mrb[0].mxu0 %v524
      %v855 = vpop.f32.mrb[0].mxu0
      %v856 = vadd.f32 0.0, %v855
      %v857 = vpop.f32.mrb[0].mxu0
      %v858 = vadd.f32 0.0, %v857
      %v859 = vpop.f32.mrb[0].mxu0
      %v860 = vadd.f32 0.0, %v859
      %v861 = vpop.f32.mrb[0].mxu0
      %v862 = vadd.f32 0.0, %v861
      %863 = vdwg.mxu0
      %v864 = vadd.f32 %v753, %v757
      %v865 = vadd.f32 %v864, %v763
      %v866 = vadd.f32 %v865, %v767
      %v867 = vadd.f32 %v866, %v773
      %v868 = vadd.f32 %v867, %v777
      %v869 = vadd.f32 %v868, %v783
      %v870 = vadd.f32 %v869, %v787
      %v871 = vrot.slane %v870, 4
      %v872 = vadd.f32 %v870, %v871
      %v873 = vrot.slane %v872, 2
      %v874 = vadd.f32 %v872, %v873
      %v875 = vrot.slane %v874, 1
      %v876 = vadd.f32 %v874, %v875
      %v877 = vadd.f32 %v755, %v759
      %v878 = vadd.f32 %v877, %v765
      %v879 = vadd.f32 %v878, %v769
      %v880 = vadd.f32 %v879, %v775
      %v881 = vadd.f32 %v880, %v779
      %v882 = vadd.f32 %v881, %v785
      %v883 = vadd.f32 %v882, %v789
      %v884 = vrot.slane %v883, 4
      %v885 = vadd.f32 %v883, %v884
      %v886 = vrot.slane %v885, 2
      %v887 = vadd.f32 %v885, %v886
      %v888 = vrot.slane %v887, 1
      %v889 = vadd.f32 %v887, %v888
      %v890 = vadd.f32 %v826, %v830
      %v891 = vadd.f32 %v890, %v836
      %v892 = vadd.f32 %v891, %v840
      %v893 = vadd.f32 %v892, %v846
      %v894 = vadd.f32 %v893, %v850
      %v895 = vadd.f32 %v894, %v856
      %v896 = vadd.f32 %v895, %v860
      %v897 = vrot.slane %v896, 4
      %v898 = vadd.f32 %v896, %v897
      %v899 = vrot.slane %v898, 2
      %v900 = vadd.f32 %v898, %v899
      %v901 = vrot.slane %v900, 1
      %v902 = vadd.f32 %v900, %v901
      %v903 = vadd.f32 %v828, %v832
      %v904 = vadd.f32 %v903, %v838
      %v905 = vadd.f32 %v904, %v842
      %v906 = vadd.f32 %v905, %v848
      %v907 = vadd.f32 %v906, %v852
      %v908 = vadd.f32 %v907, %v858
      %v909 = vadd.f32 %v908, %v862
      %v910 = vrot.slane %v909, 4
      %v911 = vadd.f32 %v909, %v910
      %v912 = vrot.slane %v911, 2
      %v913 = vadd.f32 %v911, %v912
      %v914 = vrot.slane %v913, 1
      %v915 = vadd.f32 %v913, %v914
      %v916 = vmul.f32 %v753, %v753
      %v917 = vmul.f32 %v755, %v755
      %v918 = vmul.f32 %v826, %v826
      %v919 = vmul.f32 %v828, %v828
      %v920 = vmul.f32 %v757, %v757
      %v921 = vmul.f32 %v759, %v759
      %v922 = vmul.f32 %v830, %v830
      %v923 = vmul.f32 %v832, %v832
      %v924 = vmul.f32 %v763, %v763
      %v925 = vmul.f32 %v765, %v765
      %v926 = vmul.f32 %v836, %v836
      %v927 = vmul.f32 %v838, %v838
      %v928 = vmul.f32 %v767, %v767
      %v929 = vmul.f32 %v769, %v769
      %v930 = vmul.f32 %v840, %v840
      %v931 = vmul.f32 %v842, %v842
      %v932 = vmul.f32 %v773, %v773
      %v933 = vmul.f32 %v775, %v775
      %v934 = vmul.f32 %v846, %v846
      %v935 = vmul.f32 %v848, %v848
      %v936 = vmul.f32 %v777, %v777
      %v937 = vmul.f32 %v779, %v779
      %v938 = vmul.f32 %v850, %v850
      %v939 = vmul.f32 %v852, %v852
      %v940 = vmul.f32 %v783, %v783
      %v941 = vmul.f32 %v785, %v785
      %v942 = vmul.f32 %v856, %v856
      %v943 = vmul.f32 %v858, %v858
      %v944 = vmul.f32 %v787, %v787
      %v945 = vmul.f32 %v789, %v789
      %v946 = vmul.f32 %v860, %v860
      %v947 = vmul.f32 %v862, %v862
      %v948 = vadd.f32 %v916, %v920
      %v949 = vadd.f32 %v948, %v924
      %v950 = vadd.f32 %v949, %v928
      %v951 = vadd.f32 %v950, %v932
      %v952 = vadd.f32 %v951, %v936
      %v953 = vadd.f32 %v952, %v940
      %v954 = vadd.f32 %v953, %v944
      %v955 = vrot.slane %v954, 4
      %v956 = vadd.f32 %v954, %v955
      %v957 = vrot.slane %v956, 2
      %v958 = vadd.f32 %v956, %v957
      %v959 = vrot.slane %v958, 1
      %v960 = vadd.f32 %v958, %v959
      %v961 = vadd.f32 %v917, %v921
      %v962 = vadd.f32 %v961, %v925
      %v963 = vadd.f32 %v962, %v929
      %v964 = vadd.f32 %v963, %v933
      %v965 = vadd.f32 %v964, %v937
      %v966 = vadd.f32 %v965, %v941
      %v967 = vadd.f32 %v966, %v945
      %v968 = vrot.slane %v967, 4
      %v969 = vadd.f32 %v967, %v968
      %v970 = vrot.slane %v969, 2
      %v971 = vadd.f32 %v969, %v970
      %v972 = vrot.slane %v971, 1
      %v973 = vadd.f32 %v971, %v972
      %v974 = vadd.f32 %v918, %v922
      %v975 = vadd.f32 %v974, %v926
      %v976 = vadd.f32 %v975, %v930
      %v977 = vadd.f32 %v976, %v934
      %v978 = vadd.f32 %v977, %v938
      %v979 = vadd.f32 %v978, %v942
      %v980 = vadd.f32 %v979, %v946
      %v981 = vrot.slane %v980, 4
      %v982 = vadd.f32 %v980, %v981
      %v983 = vrot.slane %v982, 2
      %v984 = vadd.f32 %v982, %v983
      %v985 = vrot.slane %v984, 1
      %v986 = vadd.f32 %v984, %v985
      %v987 = vadd.f32 %v919, %v923
      %v988 = vadd.f32 %v987, %v927
      %v989 = vadd.f32 %v988, %v931
      %v990 = vadd.f32 %v989, %v935
      %v991 = vadd.f32 %v990, %v939
      %v992 = vadd.f32 %v991, %v943
      %v993 = vadd.f32 %v992, %v947
      %v994 = vrot.slane %v993, 4
      %v995 = vadd.f32 %v993, %v994
      %v996 = vrot.slane %v995, 2
      %v997 = vadd.f32 %v995, %v996
      %v998 = vrot.slane %v997, 1
      %v999 = vadd.f32 %v997, %v998
      %v1000 = vadd.f32 %v876, %v889
      %v1001 = vadd.f32 %v1000, %v902
      %v1002 = vadd.f32 %v1001, %v915
      %v1003 = vadd.f32 %v960, %v973
      %v1004 = vadd.f32 %v1003, %v986
      %v1005 = vadd.f32 %v1004, %v999
      %vm1006 = vcmask 1040384
      %v1007 = vsel %vm1006, %v1002, %v1005
      %1008 = vst [vmem:[%s141] sm:$0x3] %v1007
      %p1009 = scmp.lt.s32.totalorder %s13, 1
      %s1010 = scalar_select %p1009, %s13, 1
      %s1011 = smul.addr %s1010, 2
      %s1012 = scalar_lea.vmem %s2, %s1011
      // Predicated region
      $region29: #{decoder_block_forward.2} parent=27 // pred_check
        %p1013 = pneg %p78
      $region30: #{decoder_block_forward.2} parent=27 // pred_check_branch
        %1015 = sbr.rel (%p1013) target = $region32
      $region31: #{decoder_block_forward.2} parent=27 // pred_region
        _
      $region32: #{decoder_block_forward.2} parent=27 // pred_fallthru
        _
    $region28: #{decoder_block_forward.2} parent=5 // pred_fallthru
      _
    %p1016 = scmp.le.s32.totalorder 2, %s8
    // Predicated region
    $region33: #{decoder_block_forward.2} parent=5 // pred_check
      %p1017 = pneg %p1016
    $region34: #{decoder_block_forward.2} parent=5 // pred_check_branch
      %1019 = sbr.rel (%p1017) target = $region36
    $region35: #{decoder_block_forward.2} parent=5 // pred_region
      %s1020 = ssub.s32 %s8, 2
      // Predicated region
      $region37: #{decoder_block_forward.2} parent=35 // pred_check
        %p1021 = pneg %p84
      $region38: #{decoder_block_forward.2} parent=35 // pred_check_branch
        %1023 = sbr.rel (%p1021) target = $region40
      $region39: #{decoder_block_forward.2} parent=35 // pred_region
        %p1024 = scmp.lt.s32.totalorder %s14, 1
        %s1025 = scalar_select %p1024, %s14, 1
        %s1026 = smul.addr %s1025, 2
        %s1027 = scalar_lea.vmem %s2, %s1026
      $region40: #{decoder_block_forward.2} parent=35 // pred_fallthru
        _
    $region36: #{decoder_block_forward.2} parent=5 // pred_fallthru
      _
  $region6: #{decoder_block_forward.2} parent=0 // loop_footer
    %s12 = sadd.s32 1, %s8
  $region7: #{decoder_block_forward.2} parent=0 // loop_footer_branch
    %7 = sbr.rel target = $region3
  $region8: #{decoder_block_forward.2} parent=0 // loop_exit
    _

// kernel: decoder_block_forward.3
$region0: #{decoder_block_forward.3}
  #allocation0 [shape = 'u32[]', space=smem, size = 0x4, offset = 0x4, fixed_abs, tag = 'smem constant byte address 0x4 - core index']
  #allocation1 [shape = 'u32[144,128]{1,0:T(1,128)}', space=vmem, size = 0x12000, scoped, tag = 'internal scratch']
  %s0 = inlined_call_operand.vmem [shape: bf16[2,9,9,32], index: 0, kind: input, shape index: {}]
  %s1 = inlined_call_operand.vmem [shape: bf16[128,512], index: 1, kind: input, shape index: {}]
  %s2 = inlined_call_operand.vmem [shape: f32[1,512], index: 2, kind: input, shape index: {}]
  %s3 = inlined_call_operand.vmem [shape: f32[1,512], index: 3, kind: input, shape index: {}]
  %s4 = inlined_call_operand.vmem [shape: f32[2,64,512], index: 4, kind: output, shape index: {}]
  %s5 = sld [smem:[#allocation0]]
  $region49: #{decoder_block_forward.3} parent=0
    _
  %s7 = ssub.s32 1, %s5
  %s8 = scalar_select 0, %s7, %s5
  loop: start=0, step=1, limit=4
  $region2: #{decoder_block_forward.3} parent=0 // loop_pre_header
    _
  $region3: #{decoder_block_forward.3} parent=0 // loop_header
    %s10 = sphi 0, %s14
    %p11 = scmp.ge.s32.totalorder %s10, 4
    %s20 = sphi 0, %s22
    %s23 = sphi 0, %s20
    %s24 = sphi 0, %s23
    %s40 = sphi 0, %s24
    %s44 = sphi 0, %s44
    %s46 = sphi 0, %s44
    %s47 = sphi 0, %s46
    %s61 = sphi 0, %s47
    %s65 = sphi 0, %s65
    %s67 = sphi 0, %s65
    %s68 = sphi 0, %s67
    %s82 = sphi 0, %s68
    %s86 = sphi 0, %s86
    %s88 = sphi 0, %s86
    %s89 = sphi 0, %s88
    %s103 = sphi 0, %s89
    %s109 = sphi 0, %s111
    %s112 = sphi 0, %s109
    %s113 = sphi 0, %s112
    %s129 = sphi 0, %s113
  $region4: #{decoder_block_forward.3} parent=0 // loop_header_branch
    %13 = sbr.rel (%p11) target = $region8
  $region5: #{decoder_block_forward.3} parent=0 // loop_body
    %s15 = ssub.s32 %s10, 1
    %s16 = ssub.s32 %s10, 2
    %s17 = sadd.s32 %s10, 1
    %s18 = ssub.s32 %s10, %s17
    %p19 = scmp.eq.s32.totalorder %s18, 0
    %s21 = sadd.s32 %s20, 1
    %s22 = scalar_select %p19, %s20, %s21
    %p25 = pneg %p19
    %p26 = scmp.eq.s32.totalorder %s10, 1
    %p27 = por %p25, %p26
    %p28 = scmp.ne.s32.totalorder %s20, %s23
    %p29 = scmp.eq.s32.totalorder %s10, 0
    %p30 = por %p28, %p29
    %p31 = scmp.ne.s32.totalorder %s20, %s23
    %p32 = scmp.eq.s32.totalorder %s15, 1
    %p33 = por %p31, %p32
    %p34 = scmp.ne.s32.totalorder %s23, %s24
    %p35 = scmp.eq.s32.totalorder %s15, 0
    %p36 = por %p34, %p35
    %p37 = scmp.ne.s32.totalorder %s23, %s24
    %p38 = scmp.eq.s32.totalorder %s16, 1
    %p39 = por %p37, %p38
    %p41 = scmp.ne.s32.totalorder %s24, %s40
    %p42 = scmp.eq.s32.totalorder %s16, 0
    %p43 = por %p41, %p42
    %s45 = sadd.s32 %s44, 1
    %p48 = scmp.eq.s32.totalorder %s10, 1
    %p49 = scmp.ne.s32.totalorder %s44, %s46
    %p50 = scmp.eq.s32.totalorder %s10, 0
    %p51 = por %p49, %p50
    %p52 = scmp.ne.s32.totalorder %s44, %s46
    %p53 = scmp.eq.s32.totalorder %s15, 1
    %p54 = por %p52, %p53
    %p55 = scmp.ne.s32.totalorder %s46, %s47
    %p56 = scmp.eq.s32.totalorder %s15, 0
    %p57 = por %p55, %p56
    %p58 = scmp.ne.s32.totalorder %s46, %s47
    %p59 = scmp.eq.s32.totalorder %s16, 1
    %p60 = por %p58, %p59
    %p62 = scmp.ne.s32.totalorder %s47, %s61
    %p63 = scmp.eq.s32.totalorder %s16, 0
    %p64 = por %p62, %p63
    %s66 = sadd.s32 %s65, 1
    %p69 = scmp.eq.s32.totalorder %s10, 1
    %p70 = scmp.ne.s32.totalorder %s65, %s67
    %p71 = scmp.eq.s32.totalorder %s10, 0
    %p72 = por %p70, %p71
    %p73 = scmp.ne.s32.totalorder %s65, %s67
    %p74 = scmp.eq.s32.totalorder %s15, 1
    %p75 = por %p73, %p74
    %p76 = scmp.ne.s32.totalorder %s67, %s68
    %p77 = scmp.eq.s32.totalorder %s15, 0
    %p78 = por %p76, %p77
    %p79 = scmp.ne.s32.totalorder %s67, %s68
    %p80 = scmp.eq.s32.totalorder %s16, 1
    %p81 = por %p79, %p80
    %p83 = scmp.ne.s32.totalorder %s68, %s82
    %p84 = scmp.eq.s32.totalorder %s16, 0
    %p85 = por %p83, %p84
    %s87 = sadd.s32 %s86, 1
    %p90 = scmp.eq.s32.totalorder %s10, 1
    %p91 = scmp.ne.s32.totalorder %s86, %s88
    %p92 = scmp.eq.s32.totalorder %s10, 0
    %p93 = por %p91, %p92
    %p94 = scmp.ne.s32.totalorder %s86, %s88
    %p95 = scmp.eq.s32.totalorder %s15, 1
    %p96 = por %p94, %p95
    %p97 = scmp.ne.s32.totalorder %s88, %s89
    %p98 = scmp.eq.s32.totalorder %s15, 0
    %p99 = por %p97, %p98
    %p100 = scmp.ne.s32.totalorder %s88, %s89
    %p101 = scmp.eq.s32.totalorder %s16, 1
    %p102 = por %p100, %p101
    %p104 = scmp.ne.s32.totalorder %s89, %s103
    %p105 = scmp.eq.s32.totalorder %s16, 0
    %p106 = por %p104, %p105
    %s107 = ssub.s32 %s10, %s17
    %p108 = scmp.eq.s32.totalorder %s107, 0
    %s110 = sadd.s32 %s109, 1
    %s111 = scalar_select %p108, %s109, %s110
    %p114 = pneg %p108
    %p115 = scmp.eq.s32.totalorder %s10, 1
    %p116 = por %p114, %p115
    %p117 = scmp.ne.s32.totalorder %s109, %s112
    %p118 = scmp.eq.s32.totalorder %s10, 0
    %p119 = por %p117, %p118
    %p120 = scmp.ne.s32.totalorder %s109, %s112
    %p121 = scmp.eq.s32.totalorder %s15, 1
    %p122 = por %p120, %p121
    %p123 = scmp.ne.s32.totalorder %s112, %s113
    %p124 = scmp.eq.s32.totalorder %s15, 0
    %p125 = por %p123, %p124
    %p126 = scmp.ne.s32.totalorder %s112, %s113
    %p127 = scmp.eq.s32.totalorder %s16, 1
    %p128 = por %p126, %p127
    %p130 = scmp.ne.s32.totalorder %s113, %s129
    %p131 = scmp.eq.s32.totalorder %s16, 0
    %p132 = por %p130, %p131
    %p133 = scmp.le.s32.totalorder 1, %s10
    %p134 = scmp.lt.s32.totalorder %s10, 3
    %p135 = pnand %p133, %p134
    %p136 = pneg %p135
    // Predicated region
    $region9: #{decoder_block_forward.3} parent=5 // pred_check
      _
    $region10: #{decoder_block_forward.3} parent=5 // pred_check_branch
      %138 = sbr.rel (%p135) target = $region12
    $region11: #{decoder_block_forward.3} parent=5 // pred_region
      %s139 = ssub.s32 %s10, 1
      // Predicated region
      $region13: #{decoder_block_forward.3} parent=11 // pred_check
        %p140 = pneg %p57
      $region14: #{decoder_block_forward.3} parent=11 // pred_check_branch
        %142 = sbr.rel (%p140) target = $region16
      $region15: #{decoder_block_forward.3} parent=11 // pred_region
        _
      $region16: #{decoder_block_forward.3} parent=11 // pred_fallthru
        _
      // Predicated region
      $region17: #{decoder_block_forward.3} parent=11 // pred_check
        %p143 = pneg %p78
      $region18: #{decoder_block_forward.3} parent=11 // pred_check_branch
        %145 = sbr.rel (%p143) target = $region20
      $region19: #{decoder_block_forward.3} parent=11 // pred_region
        _
      $region20: #{decoder_block_forward.3} parent=11 // pred_fallthru
        _
      // Predicated region
      $region21: #{decoder_block_forward.3} parent=11 // pred_check
        %p146 = pneg %p99
      $region22: #{decoder_block_forward.3} parent=11 // pred_check_branch
        %148 = sbr.rel (%p146) target = $region24
      $region23: #{decoder_block_forward.3} parent=11 // pred_region
        _
      $region24: #{decoder_block_forward.3} parent=11 // pred_fallthru
        _
    $region12: #{decoder_block_forward.3} parent=5 // pred_fallthru
      _
    %p149 = scmp.lt.s32.totalorder %s10, 2
    // Predicated region
    $region25: #{decoder_block_forward.3} parent=5 // pred_check
      %p150 = pneg %p149
    $region26: #{decoder_block_forward.3} parent=5 // pred_check_branch
      %152 = sbr.rel (%p150) target = $region28
    $region27: #{decoder_block_forward.3} parent=5 // pred_region
      // Predicated region
      $region29: #{decoder_block_forward.3} parent=27 // pred_check
        %p153 = pneg %p30
      $region30: #{decoder_block_forward.3} parent=27 // pred_check_branch
        %155 = sbr.rel (%p153) target = $region32
      $region31: #{decoder_block_forward.3} parent=27 // pred_region
        %p156 = scmp.lt.s32.totalorder %s10, 1
        %s157 = scalar_select %p156, %s10, 1
        %s158 = smul.addr %s157, 18
        %s159 = smul.addr %s158, 4
        %s160 = scalar_lea.vmem %s0, %s159
      $region32: #{decoder_block_forward.3} parent=27 // pred_fallthru
        _
    $region28: #{decoder_block_forward.3} parent=5 // pred_fallthru
      _
    %p161 = scmp.le.s32.totalorder 1, %s10
    %p162 = scmp.lt.s32.totalorder %s10, 3
    %p163 = pnand %p161, %p162
    %p164 = pneg %p163
    // Predicated region
    $region33: #{decoder_block_forward.3} parent=5 // pred_check
      _
    $region34: #{decoder_block_forward.3} parent=5 // pred_check_branch
      %166 = sbr.rel (%p163) target = $region36
    $region35: #{decoder_block_forward.3} parent=5 // pred_region
      %s167 = ssub.s32 %s10, 1
      %p168 = scmp.lt.s32.totalorder %s15, 1
      %s169 = scalar_select %p168, %s15, 1
      %s170 = smul.addr %s169, 18
      %s171 = smul.addr %s170, 4
      %s172 = scalar_lea.vmem %s0, %s171
      %p173 = pneg %p36
      %p174 = pneg %p33
      %p175 = pneg %p57
      %p176 = pneg %p54
      %p177 = pneg %p78
      %p178 = pneg %p75
      %p179 = pneg %p99
      %p180 = pneg %p96
      %p181 = pneg %p125
      %p182 = pneg %p122
      %p183 = scmp.lt.s32.totalorder %s15, 1
      %s184 = scalar_select %p183, %s15, 1
      %s185 = smul.addr %s184, 32
      %s186 = smul.addr %s185, 8
      %s187 = scalar_lea.vmem %s4, %s186
      %p188 = scmp.lt.s32.totalorder %s15, 1
      %s189 = scalar_select %p188, %s15, 1
      %s190 = smul.addr %s189, 18
      %s191 = smul.addr %s190, 4
      %s192 = scalar_lea.vmem %s0, %s191
      %p193 = scmp.lt.s32.totalorder %s15, 1
      %s194 = scalar_select %p193, %s15, 1
      %s195 = smul.addr %s194, 32
      %s196 = smul.addr %s195, 8
      %s197 = scalar_lea.vmem %s4, %s196
      %v199 = vld [vmem:[%s192] sm:$0xf]
      %v200 = vld [vmem:[%s192 + $0x8] sm:$0xf]
      %v201 = vld [vmem:[%s192 + $0x10] sm:$0xf]
      %v202 = vld [vmem:[%s192 + $0x18] sm:$0xf]
      %v203 = vld [vmem:[%s192 + $0x20] sm:$0xf]
      %v204 = vld [vmem:[%s192 + $0x28] sm:$0xf]
      %v205 = vld [vmem:[%s192 + $0x30] sm:$0xf]
      %v206 = vld [vmem:[%s192 + $0x38] sm:$0xf]
      %v207 = vld [vmem:[%s192 + $0x4] sm:$0x1]
      %v208 = vld [vmem:[%s192 + $0xc] sm:$0x1]
      %v209 = vld [vmem:[%s192 + $0x14] sm:$0x1]
      %v210 = vld [vmem:[%s192 + $0x1c] sm:$0x1]
      %v211 = vld [vmem:[%s192 + $0x24] sm:$0x1]
      %v212 = vld [vmem:[%s192 + $0x2c] sm:$0x1]
      %v213 = vld [vmem:[%s192 + $0x34] sm:$0x1]
      %v214 = vld [vmem:[%s192 + $0x3c] sm:$0x1]
      %vm215 = vsmask.f32 3328
      %vm216 = vsmask.f32 7440
      %vm217 = vmor %vm215, %vm216
      %v219 = vshrl.u32 %v199, 16
      %v221 = vrot.slane %v219, 4
      %v222 = vshll.u32 %v199, 16
      %v224 = vrot.slane %v222, 5
      %v225 = vor.u32 %v221, %v224
      %v226 = vrot.slane %v225, 4
      %v228 = vshll.u32 %v207, 16
      %v230 = vrot.slane %v228, 5
      %v231 = vsel %vm217, %v226, %v230
      %v233 = vshrl.u32 %v200, 16
      %v235 = vrot.slane %v233, 4
      %v236 = vshll.u32 %v200, 16
      %v238 = vrot.slane %v236, 5
      %v239 = vor.u32 %v235, %v238
      %v240 = vrot.slane %v239, 4
      %v242 = vshll.u32 %v208, 16
      %v244 = vrot.slane %v242, 5
      %v245 = vsel %vm217, %v240, %v244
      %v247 = vshrl.u32 %v201, 16
      %v249 = vrot.slane %v247, 4
      %v250 = vshll.u32 %v201, 16
      %v252 = vrot.slane %v250, 5
      %v253 = vor.u32 %v249, %v252
      %v254 = vrot.slane %v253, 4
      %v256 = vshll.u32 %v209, 16
      %v258 = vrot.slane %v256, 5
      %v259 = vsel %vm217, %v254, %v258
      %v261 = vshrl.u32 %v202, 16
      %v263 = vrot.slane %v261, 4
      %v264 = vshll.u32 %v202, 16
      %v266 = vrot.slane %v264, 5
      %v267 = vor.u32 %v263, %v266
      %v268 = vrot.slane %v267, 4
      %v270 = vshll.u32 %v210, 16
      %v272 = vrot.slane %v270, 5
      %v273 = vsel %vm217, %v268, %v272
      %v275 = vshrl.u32 %v203, 16
      %v277 = vrot.slane %v275, 4
      %v278 = vshll.u32 %v203, 16
      %v280 = vrot.slane %v278, 5
      %v281 = vor.u32 %v277, %v280
      %v282 = vrot.slane %v281, 4
      %v284 = vshll.u32 %v211, 16
      %v286 = vrot.slane %v284, 5
      %v287 = vsel %vm217, %v282, %v286
      %v289 = vshrl.u32 %v204, 16
      %v291 = vrot.slane %v289, 4
      %v292 = vshll.u32 %v204, 16
      %v294 = vrot.slane %v292, 5
      %v295 = vor.u32 %v291, %v294
      %v296 = vrot.slane %v295, 4
      %v298 = vshll.u32 %v212, 16
      %v300 = vrot.slane %v298, 5
      %v301 = vsel %vm217, %v296, %v300
      %v303 = vshrl.u32 %v205, 16
      %v305 = vrot.slane %v303, 4
      %v306 = vshll.u32 %v205, 16
      %v308 = vrot.slane %v306, 5
      %v309 = vor.u32 %v305, %v308
      %v310 = vrot.slane %v309, 4
      %v312 = vshll.u32 %v213, 16
      %v314 = vrot.slane %v312, 5
      %v315 = vsel %vm217, %v310, %v314
      %v317 = vshrl.u32 %v206, 16
      %v319 = vrot.slane %v317, 4
      %v320 = vshll.u32 %v206, 16
      %v322 = vrot.slane %v320, 5
      %v323 = vor.u32 %v319, %v322
      %v324 = vrot.slane %v323, 4
      %v326 = vshll.u32 %v214, 16
      %v328 = vrot.slane %v326, 5
      %v329 = vsel %vm217, %v324, %v328
      %s330 = scalar_lea.vmem %s192, 8
      %v331 = vld [vmem:[%s330] sm:$0xf]
      %v332 = vld [vmem:[%s330 + $0x8] sm:$0xf]
      %v333 = vld [vmem:[%s330 + $0x10] sm:$0xf]
      %v334 = vld [vmem:[%s330 + $0x18] sm:$0xf]
      %v335 = vld [vmem:[%s330 + $0x20] sm:$0xf]
      %v336 = vld [vmem:[%s330 + $0x28] sm:$0xf]
      %v337 = vld [vmem:[%s330 + $0x30] sm:$0xf]
      %v338 = vld [vmem:[%s330 + $0x38] sm:$0xf]
      %v339 = vld [vmem:[%s330 + $0x4] sm:$0x1]
      %v340 = vld [vmem:[%s330 + $0xc] sm:$0x1]
      %v341 = vld [vmem:[%s330 + $0x14] sm:$0x1]
      %v342 = vld [vmem:[%s330 + $0x1c] sm:$0x1]
      %v343 = vld [vmem:[%s330 + $0x24] sm:$0x1]
      %v344 = vld [vmem:[%s330 + $0x2c] sm:$0x1]
      %v345 = vld [vmem:[%s330 + $0x34] sm:$0x1]
      %v346 = vld [vmem:[%s330 + $0x3c] sm:$0x1]
      %v348 = vshrl.u32 %v331, 16
      %v350 = vrot.slane %v348, 4
      %v351 = vshll.u32 %v331, 16
      %v353 = vrot.slane %v351, 5
      %v354 = vor.u32 %v350, %v353
      %v355 = vrot.slane %v354, 4
      %v357 = vshll.u32 %v339, 16
      %v359 = vrot.slane %v357, 5
      %v360 = vsel %vm217, %v355, %v359
      %v362 = vshrl.u32 %v332, 16
      %v364 = vrot.slane %v362, 4
      %v365 = vshll.u32 %v332, 16
      %v367 = vrot.slane %v365, 5
      %v368 = vor.u32 %v364, %v367
      %v369 = vrot.slane %v368, 4
      %v371 = vshll.u32 %v340, 16
      %v373 = vrot.slane %v371, 5
      %v374 = vsel %vm217, %v369, %v373
      %v376 = vshrl.u32 %v333, 16
      %v378 = vrot.slane %v376, 4
      %v379 = vshll.u32 %v333, 16
      %v381 = vrot.slane %v379, 5
      %v382 = vor.u32 %v378, %v381
      %v383 = vrot.slane %v382, 4
      %v385 = vshll.u32 %v341, 16
      %v387 = vrot.slane %v385, 5
      %v388 = vsel %vm217, %v383, %v387
      %v390 = vshrl.u32 %v334, 16
      %v392 = vrot.slane %v390, 4
      %v393 = vshll.u32 %v334, 16
      %v395 = vrot.slane %v393, 5
      %v396 = vor.u32 %v392, %v395
      %v397 = vrot.slane %v396, 4
      %v399 = vshll.u32 %v342, 16
      %v401 = vrot.slane %v399, 5
      %v402 = vsel %vm217, %v397, %v401
      %v404 = vshrl.u32 %v335, 16
      %v406 = vrot.slane %v404, 4
      %v407 = vshll.u32 %v335, 16
      %v409 = vrot.slane %v407, 5
      %v410 = vor.u32 %v406, %v409
      %v411 = vrot.slane %v410, 4
      %v413 = vshll.u32 %v343, 16
      %v415 = vrot.slane %v413, 5
      %v416 = vsel %vm217, %v411, %v415
      %v418 = vshrl.u32 %v336, 16
      %v420 = vrot.slane %v418, 4
      %v421 = vshll.u32 %v336, 16
      %v423 = vrot.slane %v421, 5
      %v424 = vor.u32 %v420, %v423
      %v425 = vrot.slane %v424, 4
      %v427 = vshll.u32 %v344, 16
      %v429 = vrot.slane %v427, 5
      %v430 = vsel %vm217, %v425, %v429
      %v432 = vshrl.u32 %v337, 16
      %v434 = vrot.slane %v432, 4
      %v435 = vshll.u32 %v337, 16
      %v437 = vrot.slane %v435, 5
      %v438 = vor.u32 %v434, %v437
      %v439 = vrot.slane %v438, 4
      %v441 = vshll.u32 %v345, 16
      %v443 = vrot.slane %v441, 5
      %v444 = vsel %vm217, %v439, %v443
      %v446 = vshrl.u32 %v338, 16
      %v448 = vrot.slane %v446, 4
      %v449 = vshll.u32 %v338, 16
      %v451 = vrot.slane %v449, 5
      %v452 = vor.u32 %v448, %v451
      %v453 = vrot.slane %v452, 4
      %v455 = vshll.u32 %v346, 16
      %v457 = vrot.slane %v455, 5
      %v458 = vsel %vm217, %v453, %v457
      %v467 = vunpack.c.l.b16 %v199
      %v468 = vunpack.c.l.b16 %v200
      %v469 = vunpack.c.l.b16 %v201
      %v470 = vunpack.c.l.b16 %v202
      %v471 = vunpack.c.l.b16 %v203
      %v472 = vunpack.c.l.b16 %v204
      %v473 = vunpack.c.l.b16 %v205
      %v474 = vunpack.c.l.b16 %v206
      %v475 = vpack.c.b16 %v468, %v467
      %v476 = vpack.c.b16 %v470, %v469
      %v477 = vpack.c.b16 %v472, %v471
      %v478 = vpack.c.b16 %v474, %v473
      %v479 = vunpack.c.l.b16 %v231
      %v480 = vunpack.c.l.b16 %v245
      %v481 = vunpack.c.l.b16 %v259
      %v482 = vunpack.c.l.b16 %v273
      %v483 = vunpack.c.l.b16 %v287
      %v484 = vunpack.c.l.b16 %v301
      %v485 = vunpack.c.l.b16 %v315
      %v486 = vunpack.c.l.b16 %v329
      %v487 = vpack.c.b16 %v480, %v479
      %v488 = vpack.c.b16 %v482, %v481
      %v489 = vpack.c.b16 %v484, %v483
      %v490 = vpack.c.b16 %v486, %v485
      %491 = vrot.lane.b32.xlu0 %v487, 32
      %v492 = vpop.permute.xlu0 %491
      %493 = vrot.lane.b32.xlu0 %v488, 32
      %v494 = vpop.permute.xlu0 %493
      %495 = vrot.lane.b32.xlu0 %v489, 32
      %v496 = vpop.permute.xlu0 %495
      %497 = vrot.lane.b32.xlu0 %v490, 32
      %v498 = vpop.permute.xlu0 %497
      %v507 = vunpack.c.l.b16 %v331
      %v508 = vunpack.c.l.b16 %v332
      %v509 = vunpack.c.l.b16 %v333
      %v510 = vunpack.c.l.b16 %v334
      %v511 = vunpack.c.l.b16 %v335
      %v512 = vunpack.c.l.b16 %v336
      %v513 = vunpack.c.l.b16 %v337
      %v514 = vunpack.c.l.b16 %v338
      %v515 = vpack.c.b16 %v508, %v507
      %v516 = vpack.c.b16 %v510, %v509
      %v517 = vpack.c.b16 %v512, %v511
      %v518 = vpack.c.b16 %v514, %v513
      %519 = vrot.lane.b32.xlu0 %v515, 64
      %v520 = vpop.permute.xlu0 %519
      %521 = vrot.lane.b32.xlu0 %v516, 64
      %v522 = vpop.permute.xlu0 %521
      %523 = vrot.lane.b32.xlu0 %v517, 64
      %v524 = vpop.permute.xlu0 %523
      %525 = vrot.lane.b32.xlu0 %v518, 64
      %v526 = vpop.permute.xlu0 %525
      %v527 = vunpack.c.l.b16 %v360
      %v528 = vunpack.c.l.b16 %v374
      %v529 = vunpack.c.l.b16 %v388
      %v530 = vunpack.c.l.b16 %v402
      %v531 = vunpack.c.l.b16 %v416
      %v532 = vunpack.c.l.b16 %v430
      %v533 = vunpack.c.l.b16 %v444
      %v534 = vunpack.c.l.b16 %v458
      %v535 = vpack.c.b16 %v528, %v527
      %v536 = vpack.c.b16 %v530, %v529
      %v537 = vpack.c.b16 %v532, %v531
      %v538 = vpack.c.b16 %v534, %v533
      %539 = vrot.lane.b32.xlu0 %v535, 96
      %v540 = vpop.permute.xlu0 %539
      %541 = vrot.lane.b32.xlu0 %v536, 96
      %v542 = vpop.permute.xlu0 %541
      %543 = vrot.lane.b32.xlu0 %v537, 96
      %v544 = vpop.permute.xlu0 %543
      %545 = vrot.lane.b32.xlu0 %v538, 96
      %v546 = vpop.permute.xlu0 %545
      %vm547 = vcmask 261120
      %v550 = vsel %vm547, %v475, %v492
      %v553 = vsel %vm547, %v476, %v494
      %v556 = vsel %vm547, %v477, %v496
      %v559 = vsel %vm547, %v478, %v498
      %vm560 = vcmask 523264
      %v562 = vsel %vm560, %v550, %v520
      %v564 = vsel %vm560, %v553, %v522
      %v566 = vsel %vm560, %v556, %v524
      %v568 = vsel %vm560, %v559, %v526
      %vm569 = vcmask 785408
      %v571 = vsel %vm569, %v562, %v540
      %v574 = vsel %vm569, %v564, %v542
      %v577 = vsel %vm569, %v566, %v544
      %v580 = vsel %vm569, %v568, %v546
      %v582 = vld [vmem:[%s1] sm:$0xff]
      %v583 = vld [vmem:[%s1 + $0x8] sm:$0xff]
      %v584 = vld [vmem:[%s1 + $0x10] sm:$0xff]
      %v585 = vld [vmem:[%s1 + $0x18] sm:$0xff]
      %v586 = vld [vmem:[%s1 + $0x20] sm:$0xff]
      %v587 = vld [vmem:[%s1 + $0x28] sm:$0xff]
      %v588 = vld [vmem:[%s1 + $0x30] sm:$0xff]
      %v589 = vld [vmem:[%s1 + $0x38] sm:$0xff]
      %v590 = vld [vmem:[%s1 + $0x40] sm:$0xff]
      %v591 = vld [vmem:[%s1 + $0x48] sm:$0xff]
      %v592 = vld [vmem:[%s1 + $0x50] sm:$0xff]
      %v593 = vld [vmem:[%s1 + $0x58] sm:$0xff]
      %v594 = vld [vmem:[%s1 + $0x60] sm:$0xff]
      %v595 = vld [vmem:[%s1 + $0x68] sm:$0xff]
      %v596 = vld [vmem:[%s1 + $0x70] sm:$0xff]
      %v597 = vld [vmem:[%s1 + $0x78] sm:$0xff]
      %v598 = vld [vmem:[%s1 + $0x80] sm:$0xff]
      %v599 = vld [vmem:[%s1 + $0x88] sm:$0xff]
      %v600 = vld [vmem:[%s1 + $0x90] sm:$0xff]
      %v601 = vld [vmem:[%s1 + $0x98] sm:$0xff]
      %v602 = vld [vmem:[%s1 + $0xa0] sm:$0xff]
      %v603 = vld [vmem:[%s1 + $0xa8] sm:$0xff]
      %v604 = vld [vmem:[%s1 + $0xb0] sm:$0xff]
      %v605 = vld [vmem:[%s1 + $0xb8] sm:$0xff]
      %v606 = vld [vmem:[%s1 + $0xc0] sm:$0xff]
      %v607 = vld [vmem:[%s1 + $0xc8] sm:$0xff]
      %v608 = vld [vmem:[%s1 + $0xd0] sm:$0xff]
      %v609 = vld [vmem:[%s1 + $0xd8] sm:$0xff]
      %v610 = vld [vmem:[%s1 + $0xe0] sm:$0xff]
      %v611 = vld [vmem:[%s1 + $0xe8] sm:$0xff]
      %v612 = vld [vmem:[%s1 + $0xf0] sm:$0xff]
      %v613 = vld [vmem:[%s1 + $0xf8] sm:$0xff]
      %v646 = vunpack.c.l.b16 %v582
      %v647 = vunpack.c.h.b16 %v582
      %v648 = vunpack.c.l.b16 %v583
      %v649 = vunpack.c.h.b16 %v583
      %v650 = vunpack.c.l.b16 %v584
      %v651 = vunpack.c.h.b16 %v584
      %v652 = vunpack.c.l.b16 %v585
      %v653 = vunpack.c.h.b16 %v585
      %v654 = vunpack.c.l.b16 %v586
      %v655 = vunpack.c.h.b16 %v586
      %v656 = vunpack.c.l.b16 %v587
      %v657 = vunpack.c.h.b16 %v587
      %v658 = vunpack.c.l.b16 %v588
      %v659 = vunpack.c.h.b16 %v588
      %v660 = vunpack.c.l.b16 %v589
      %v661 = vunpack.c.h.b16 %v589
      %v662 = vunpack.c.l.b16 %v590
      %v663 = vunpack.c.h.b16 %v590
      %v664 = vunpack.c.l.b16 %v591
      %v665 = vunpack.c.h.b16 %v591
      %v666 = vunpack.c.l.b16 %v592
      %v667 = vunpack.c.h.b16 %v592
      %v668 = vunpack.c.l.b16 %v593
      %v669 = vunpack.c.h.b16 %v593
      %v670 = vunpack.c.l.b16 %v594
      %v671 = vunpack.c.h.b16 %v594
      %v672 = vunpack.c.l.b16 %v595
      %v673 = vunpack.c.h.b16 %v595
      %v674 = vunpack.c.l.b16 %v596
      %v675 = vunpack.c.h.b16 %v596
      %v676 = vunpack.c.l.b16 %v597
      %v677 = vunpack.c.h.b16 %v597
      %v678 = vunpack.c.l.b16 %v598
      %v679 = vunpack.c.h.b16 %v598
      %v680 = vunpack.c.l.b16 %v599
      %v681 = vunpack.c.h.b16 %v599
      %v682 = vunpack.c.l.b16 %v600
      %v683 = vunpack.c.h.b16 %v600
      %v684 = vunpack.c.l.b16 %v601
      %v685 = vunpack.c.h.b16 %v601
      %v686 = vunpack.c.l.b16 %v602
      %v687 = vunpack.c.h.b16 %v602
      %v688 = vunpack.c.l.b16 %v603
      %v689 = vunpack.c.h.b16 %v603
      %v690 = vunpack.c.l.b16 %v604
      %v691 = vunpack.c.h.b16 %v604
      %v692 = vunpack.c.l.b16 %v605
      %v693 = vunpack.c.h.b16 %v605
      %v694 = vunpack.c.l.b16 %v606
      %v695 = vunpack.c.h.b16 %v606
      %v696 = vunpack.c.l.b16 %v607
      %v697 = vunpack.c.h.b16 %v607
      %v698 = vunpack.c.l.b16 %v608
      %v699 = vunpack.c.h.b16 %v608
      %v700 = vunpack.c.l.b16 %v609
      %v701 = vunpack.c.h.b16 %v609
      %v702 = vunpack.c.l.b16 %v610
      %v703 = vunpack.c.h.b16 %v610
      %v704 = vunpack.c.l.b16 %v611
      %v705 = vunpack.c.h.b16 %v611
      %v706 = vunpack.c.l.b16 %v612
      %v707 = vunpack.c.h.b16 %v612
      %v708 = vunpack.c.l.b16 %v613
      %v709 = vunpack.c.h.b16 %v613
      %v710 = vpack.c.b16 %v650, %v646
      %v711 = vpack.c.b16 %v651, %v647
      %v712 = vpack.c.b16 %v652, %v648
      %v713 = vpack.c.b16 %v653, %v649
      %v714 = vpack.c.b16 %v658, %v654
      %v715 = vpack.c.b16 %v659, %v655
      %v716 = vpack.c.b16 %v660, %v656
      %v717 = vpack.c.b16 %v661, %v657
      %v718 = vpack.c.b16 %v666, %v662
      %v719 = vpack.c.b16 %v667, %v663
      %v720 = vpack.c.b16 %v668, %v664
      %v721 = vpack.c.b16 %v669, %v665
      %v722 = vpack.c.b16 %v674, %v670
      %v723 = vpack.c.b16 %v675, %v671
      %v724 = vpack.c.b16 %v676, %v672
      %v725 = vpack.c.b16 %v677, %v673
      %v726 = vpack.c.b16 %v682, %v678
      %v727 = vpack.c.b16 %v683, %v679
      %v728 = vpack.c.b16 %v684, %v680
      %v729 = vpack.c.b16 %v685, %v681
      %v730 = vpack.c.b16 %v690, %v686
      %v731 = vpack.c.b16 %v691, %v687
      %v732 = vpack.c.b16 %v692, %v688
      %v733 = vpack.c.b16 %v693, %v689
      %v734 = vpack.c.b16 %v698, %v694
      %v735 = vpack.c.b16 %v699, %v695
      %v736 = vpack.c.b16 %v700, %v696
      %v737 = vpack.c.b16 %v701, %v697
      %v738 = vpack.c.b16 %v706, %v702
      %v739 = vpack.c.b16 %v707, %v703
      %v740 = vpack.c.b16 %v708, %v704
      %v741 = vpack.c.b16 %v709, %v705
      %774 = vmatprep.subr.bf16.mxu0 %v711
      %775 = vmatpush1.bf16.msra.mxu0 %v710
      %776 = vmatprep.subr.bf16.mxu0 %v715
      %777 = vmatpush1.bf16.msra.mxu0 %v714
      %778 = vmatprep.subr.bf16.mxu0 %v719
      %779 = vmatpush1.bf16.msra.mxu0 %v718
      %780 = vmatprep.subr.bf16.mxu0 %v723
      %781 = vmatpush1.bf16.msra.mxu0 %v722
      %782 = vmatprep.subr.bf16.mxu0 %v727
      %783 = vmatpush1.bf16.msra.mxu0 %v726
      %784 = vmatprep.subr.bf16.mxu0 %v731
      %785 = vmatpush1.bf16.msra.mxu0 %v730
      %786 = vmatprep.subr.bf16.mxu0 %v735
      %787 = vmatpush1.bf16.msra.mxu0 %v734
      %788 = vmatprep.subr.bf16.mxu0 %v739
      %789 = vmatpush1.bf16.msra.mxu0 %v738
      %790 = vmatprep.subr.bf16.mxu0 0
      %791 = vmatpush1.bf16.msra.mxu0 0
      %792 = vmatprep.subr.bf16.mxu0 0
      %793 = vmatpush1.bf16.msra.mxu0 0
      %794 = vmatprep.subr.bf16.mxu0 0
      %795 = vmatpush1.bf16.msra.mxu0 0
      %796 = vmatprep.subr.bf16.mxu0 0
      %797 = vmatpush1.bf16.msra.mxu0 0
      %798 = vmatprep.subr.bf16.mxu0 0
      %799 = vmatpush1.bf16.msra.mxu0 0
      %800 = vmatprep.subr.bf16.mxu0 0
      %801 = vmatpush1.bf16.msra.mxu0 0
      %802 = vmatprep.subr.bf16.mxu0 0
      %803 = vmatpush1.bf16.msra.mxu0 0
      %804 = vmatprep.subr.bf16.mxu0 0
      %805 = vmatpush1.bf16.msra.mxu0 0
      %806 = vmatprep.mubr.bf16.mxu0 0
      %807 = vmatmul.mubr.bf16.gmra.mrb[0].mxu0 %v571
      %v808 = vpop.f32.mrb[0].mxu0
      %v809 = vadd.f32 0.0, %v808
      %v810 = vpop.f32.mrb[0].mxu0
      %v811 = vadd.f32 0.0, %v810
      %v812 = vpop.f32.mrb[0].mxu0
      %v813 = vadd.f32 0.0, %v812
      %v814 = vpop.f32.mrb[0].mxu0
      %v815 = vadd.f32 0.0, %v814
      %816 = vmatprep.mubr.bf16.mxu0 0
      %817 = vmatmul.mubr.bf16.gmra.mrb[0].mxu0 %v574
      %v818 = vpop.f32.mrb[0].mxu0
      %v819 = vadd.f32 0.0, %v818
      %v820 = vpop.f32.mrb[0].mxu0
      %v821 = vadd.f32 0.0, %v820
      %v822 = vpop.f32.mrb[0].mxu0
      %v823 = vadd.f32 0.0, %v822
      %v824 = vpop.f32.mrb[0].mxu0
      %v825 = vadd.f32 0.0, %v824
      %826 = vmatprep.mubr.bf16.mxu0 0
      %827 = vmatmul.mubr.bf16.gmra.mrb[0].mxu0 %v577
      %v828 = vpop.f32.mrb[0].mxu0
      %v829 = vadd.f32 0.0, %v828
      %v830 = vpop.f32.mrb[0].mxu0
      %v831 = vadd.f32 0.0, %v830
      %v832 = vpop.f32.mrb[0].mxu0
      %v833 = vadd.f32 0.0, %v832
      %v834 = vpop.f32.mrb[0].mxu0
      %v835 = vadd.f32 0.0, %v834
      %836 = vmatprep.mubr.bf16.mxu0 0
      %837 = vmatmul.mubr.bf16.gmra.mrb[0].mxu0 %v580
      %v838 = vpop.f32.mrb[0].mxu0
      %v839 = vadd.f32 0.0, %v838
      %v840 = vpop.f32.mrb[0].mxu0
      %v841 = vadd.f32 0.0, %v840
      %v842 = vpop.f32.mrb[0].mxu0
      %v843 = vadd.f32 0.0, %v842
      %v844 = vpop.f32.mrb[0].mxu0
      %v845 = vadd.f32 0.0, %v844
      %846 = vdwg.mxu0
      %847 = vmatprep.subr.bf16.mxu0 %v713
      %848 = vmatpush1.bf16.msra.mxu0 %v712
      %849 = vmatprep.subr.bf16.mxu0 %v717
      %850 = vmatpush1.bf16.msra.mxu0 %v716
      %851 = vmatprep.subr.bf16.mxu0 %v721
      %852 = vmatpush1.bf16.msra.mxu0 %v720
      %853 = vmatprep.subr.bf16.mxu0 %v725
      %854 = vmatpush1.bf16.msra.mxu0 %v724
      %855 = vmatprep.subr.bf16.mxu0 %v729
      %856 = vmatpush1.bf16.msra.mxu0 %v728
      %857 = vmatprep.subr.bf16.mxu0 %v733
      %858 = vmatpush1.bf16.msra.mxu0 %v732
      %859 = vmatprep.subr.bf16.mxu0 %v737
      %860 = vmatpush1.bf16.msra.mxu0 %v736
      %861 = vmatprep.subr.bf16.mxu0 %v741
      %862 = vmatpush1.bf16.msra.mxu0 %v740
      %863 = vmatprep.subr.bf16.mxu0 0
      %864 = vmatpush1.bf16.msra.mxu0 0
      %865 = vmatprep.subr.bf16.mxu0 0
      %866 = vmatpush1.bf16.msra.mxu0 0
      %867 = vmatprep.subr.bf16.mxu0 0
      %868 = vmatpush1.bf16.msra.mxu0 0
      %869 = vmatprep.subr.bf16.mxu0 0
      %870 = vmatpush1.bf16.msra.mxu0 0
      %871 = vmatprep.subr.bf16.mxu0 0
      %872 = vmatpush1.bf16.msra.mxu0 0
      %873 = vmatprep.subr.bf16.mxu0 0
      %874 = vmatpush1.bf16.msra.mxu0 0
      %875 = vmatprep.subr.bf16.mxu0 0
      %876 = vmatpush1.bf16.msra.mxu0 0
      %877 = vmatprep.subr.bf16.mxu0 0
      %878 = vmatpush1.bf16.msra.mxu0 0
      %879 = vmatprep.mubr.bf16.mxu0 0
      %880 = vmatmul.mubr.bf16.gmra.mrb[0].mxu0 %v571
      %v881 = vpop.f32.mrb[0].mxu0
      %v882 = vadd.f32 0.0, %v881
      %v883 = vpop.f32.mrb[0].mxu0
      %v884 = vadd.f32 0.0, %v883
      %v885 = vpop.f32.mrb[0].mxu0
      %v886 = vadd.f32 0.0, %v885
      %v887 = vpop.f32.mrb[0].mxu0
      %v888 = vadd.f32 0.0, %v887
      %889 = vmatprep.mubr.bf16.mxu0 0
      %890 = vmatmul.mubr.bf16.gmra.mrb[0].mxu0 %v574
      %v891 = vpop.f32.mrb[0].mxu0
      %v892 = vadd.f32 0.0, %v891
      %v893 = vpop.f32.mrb[0].mxu0
      %v894 = vadd.f32 0.0, %v893
      %v895 = vpop.f32.mrb[0].mxu0
      %v896 = vadd.f32 0.0, %v895
      %v897 = vpop.f32.mrb[0].mxu0
      %v898 = vadd.f32 0.0, %v897
      %899 = vmatprep.mubr.bf16.mxu0 0
      %900 = vmatmul.mubr.bf16.gmra.mrb[0].mxu0 %v577
      %v901 = vpop.f32.mrb[0].mxu0
      %v902 = vadd.f32 0.0, %v901
      %v903 = vpop.f32.mrb[0].mxu0
      %v904 = vadd.f32 0.0, %v903
      %v905 = vpop.f32.mrb[0].mxu0
      %v906 = vadd.f32 0.0, %v905
      %v907 = vpop.f32.mrb[0].mxu0
      %v908 = vadd.f32 0.0, %v907
      %909 = vmatprep.mubr.bf16.mxu0 0
      %910 = vmatmul.mubr.bf16.gmra.mrb[0].mxu0 %v580
      %v911 = vpop.f32.mrb[0].mxu0
      %v912 = vadd.f32 0.0, %v911
      %v913 = vpop.f32.mrb[0].mxu0
      %v914 = vadd.f32 0.0, %v913
      %v915 = vpop.f32.mrb[0].mxu0
      %v916 = vadd.f32 0.0, %v915
      %v917 = vpop.f32.mrb[0].mxu0
      %v918 = vadd.f32 0.0, %v917
      %919 = vdwg.mxu0
      %v920 = vld [vmem:[%s2] sm:$0xf]
      %v922 = vlaneseq
      %v923 = vshrl.u32 %v922, 7
      %v924 = vsub.s32 0, %v923
      %v925 = vrot.slane %v920, %v924
      %v926 = vlaneseq
      %v927 = vshrl.u32 %v926, 7
      %v928 = vsub.s32 1, %v927
      %v929 = vrot.slane %v920, %v928
      %v930 = vlaneseq
      %v931 = vshrl.u32 %v930, 7
      %v932 = vsub.s32 2, %v931
      %v933 = vrot.slane %v920, %v932
      %v934 = vlaneseq
      %v935 = vshrl.u32 %v934, 7
      %v936 = vsub.s32 3, %v935
      %v937 = vrot.slane %v920, %v936
      %v942 = vmul.f32 %v809, %v925
      %v943 = vmul.f32 %v811, %v929
      %v944 = vmul.f32 %v882, %v933
      %v945 = vmul.f32 %v884, %v937
      %v946 = vmul.f32 %v813, %v925
      %v947 = vmul.f32 %v815, %v929
      %v948 = vmul.f32 %v886, %v933
      %v949 = vmul.f32 %v888, %v937
      %v950 = vmul.f32 %v819, %v925
      %v951 = vmul.f32 %v821, %v929
      %v952 = vmul.f32 %v892, %v933
      %v953 = vmul.f32 %v894, %v937
      %v954 = vmul.f32 %v823, %v925
      %v955 = vmul.f32 %v825, %v929
      %v956 = vmul.f32 %v896, %v933
      %v957 = vmul.f32 %v898, %v937
      %v958 = vmul.f32 %v829, %v925
      %v959 = vmul.f32 %v831, %v929
      %v960 = vmul.f32 %v902, %v933
      %v961 = vmul.f32 %v904, %v937
      %v962 = vmul.f32 %v833, %v925
      %v963 = vmul.f32 %v835, %v929
      %v964 = vmul.f32 %v906, %v933
      %v965 = vmul.f32 %v908, %v937
      %v966 = vmul.f32 %v839, %v925
      %v967 = vmul.f32 %v841, %v929
      %v968 = vmul.f32 %v912, %v933
      %v969 = vmul.f32 %v914, %v937
      %v970 = vmul.f32 %v843, %v925
      %v971 = vmul.f32 %v845, %v929
      %v972 = vmul.f32 %v916, %v933
      %v973 = vmul.f32 %v918, %v937
      %v974 = vld [vmem:[%s3] sm:$0xf]
      %v976 = vlaneseq
      %v977 = vshrl.u32 %v976, 7
      %v978 = vsub.s32 0, %v977
      %v979 = vrot.slane %v974, %v978
      %v980 = vlaneseq
      %v981 = vshrl.u32 %v980, 7
      %v982 = vsub.s32 1, %v981
      %v983 = vrot.slane %v974, %v982
      %v984 = vlaneseq
      %v985 = vshrl.u32 %v984, 7
      %v986 = vsub.s32 2, %v985
      %v987 = vrot.slane %v974, %v986
      %v988 = vlaneseq
      %v989 = vshrl.u32 %v988, 7
      %v990 = vsub.s32 3, %v989
      %v991 = vrot.slane %v974, %v990
      %v996 = vadd.f32 %v942, %v979
      %v997 = vadd.f32 %v943, %v983
      %v998 = vadd.f32 %v944, %v987
      %v999 = vadd.f32 %v945, %v991
      %v1000 = vadd.f32 %v946, %v979
      %v1001 = vadd.f32 %v947, %v983
      %v1002 = vadd.f32 %v948, %v987
      %v1003 = vadd.f32 %v949, %v991
      %v1004 = vadd.f32 %v950, %v979
      %v1005 = vadd.f32 %v951, %v983
      %v1006 = vadd.f32 %v952, %v987
      %v1007 = vadd.f32 %v953, %v991
      %v1008 = vadd.f32 %v954, %v979
      %v1009 = vadd.f32 %v955, %v983
      %v1010 = vadd.f32 %v956, %v987
      %v1011 = vadd.f32 %v957, %v991
      %v1012 = vadd.f32 %v958, %v979
      %v1013 = vadd.f32 %v959, %v983
      %v1014 = vadd.f32 %v960, %v987
      %v1015 = vadd.f32 %v961, %v991
      %v1016 = vadd.f32 %v962, %v979
      %v1017 = vadd.f32 %v963, %v983
      %v1018 = vadd.f32 %v964, %v987
      %v1019 = vadd.f32 %v965, %v991
      %v1020 = vadd.f32 %v966, %v979
      %v1021 = vadd.f32 %v967, %v983
      %v1022 = vadd.f32 %v968, %v987
      %v1023 = vadd.f32 %v969, %v991
      %v1024 = vadd.f32 %v970, %v979
      %v1025 = vadd.f32 %v971, %v983
      %v1026 = vadd.f32 %v972, %v987
      %v1027 = vadd.f32 %v973, %v991
      %v1028 = vmax.f32 %v996, 0.0
      %v1029 = vmax.f32 %v997, 0.0
      %v1030 = vmax.f32 %v998, 0.0
      %v1031 = vmax.f32 %v999, 0.0
      %v1032 = vmax.f32 %v1000, 0.0
      %v1033 = vmax.f32 %v1001, 0.0
      %v1034 = vmax.f32 %v1002, 0.0
      %v1035 = vmax.f32 %v1003, 0.0
      %v1036 = vmax.f32 %v1004, 0.0
      %v1037 = vmax.f32 %v1005, 0.0
      %v1038 = vmax.f32 %v1006, 0.0
      %v1039 = vmax.f32 %v1007, 0.0
      %v1040 = vmax.f32 %v1008, 0.0
      %v1041 = vmax.f32 %v1009, 0.0
      %v1042 = vmax.f32 %v1010, 0.0
      %v1043 = vmax.f32 %v1011, 0.0
      %v1044 = vmax.f32 %v1012, 0.0
      %v1045 = vmax.f32 %v1013, 0.0
      %v1046 = vmax.f32 %v1014, 0.0
      %v1047 = vmax.f32 %v1015, 0.0
      %v1048 = vmax.f32 %v1016, 0.0
      %v1049 = vmax.f32 %v1017, 0.0
      %v1050 = vmax.f32 %v1018, 0.0
      %v1051 = vmax.f32 %v1019, 0.0
      %v1052 = vmax.f32 %v1020, 0.0
      %v1053 = vmax.f32 %v1021, 0.0
      %v1054 = vmax.f32 %v1022, 0.0
      %v1055 = vmax.f32 %v1023, 0.0
      %v1056 = vmax.f32 %v1024, 0.0
      %v1057 = vmax.f32 %v1025, 0.0
      %v1058 = vmax.f32 %v1026, 0.0
      %v1059 = vmax.f32 %v1027, 0.0
      %1060 = vst [vmem:[%s197] sm:$0xff] %v1028
      %1061 = vst [vmem:[%s197 + $0x8] sm:$0xff] %v1029
      %1062 = vst [vmem:[%s197 + $0x10] sm:$0xff] %v1030
      %1063 = vst [vmem:[%s197 + $0x18] sm:$0xff] %v1031
      %1064 = vst [vmem:[%s197 + $0x20] sm:$0xff] %v1032
      %1065 = vst [vmem:[%s197 + $0x28] sm:$0xff] %v1033
      %1066 = vst [vmem:[%s197 + $0x30] sm:$0xff] %v1034
      %1067 = vst [vmem:[%s197 + $0x38] sm:$0xff] %v1035
      %1068 = vst [vmem:[%s197 + $0x40] sm:$0xff] %v1036
      %1069 = vst [vmem:[%s197 + $0x48] sm:$0xff] %v1037
      %1070 = vst [vmem:[%s197 + $0x50] sm:$0xff] %v1038
      %1071 = vst [vmem:[%s197 + $0x58] sm:$0xff] %v1039
      %1072 = vst [vmem:[%s197 + $0x60] sm:$0xff] %v1040
      %1073 = vst [vmem:[%s197 + $0x68] sm:$0xff] %v1041
      %1074 = vst [vmem:[%s197 + $0x70] sm:$0xff] %v1042
      %1075 = vst [vmem:[%s197 + $0x78] sm:$0xff] %v1043
      %1076 = vst [vmem:[%s197 + $0x80] sm:$0xff] %v1044
      %1077 = vst [vmem:[%s197 + $0x88] sm:$0xff] %v1045
      %1078 = vst [vmem:[%s197 + $0x90] sm:$0xff] %v1046
      %1079 = vst [vmem:[%s197 + $0x98] sm:$0xff] %v1047
      %1080 = vst [vmem:[%s197 + $0xa0] sm:$0xff] %v1048
      %1081 = vst [vmem:[%s197 + $0xa8] sm:$0xff] %v1049
      %1082 = vst [vmem:[%s197 + $0xb0] sm:$0xff] %v1050
      %1083 = vst [vmem:[%s197 + $0xb8] sm:$0xff] %v1051
      %1084 = vst [vmem:[%s197 + $0xc0] sm:$0xff] %v1052
      %1085 = vst [vmem:[%s197 + $0xc8] sm:$0xff] %v1053
      %1086 = vst [vmem:[%s197 + $0xd0] sm:$0xff] %v1054
      %1087 = vst [vmem:[%s197 + $0xd8] sm:$0xff] %v1055
      %1088 = vst [vmem:[%s197 + $0xe0] sm:$0xff] %v1056
      %1089 = vst [vmem:[%s197 + $0xe8] sm:$0xff] %v1057
      %1090 = vst [vmem:[%s197 + $0xf0] sm:$0xff] %v1058
      %1091 = vst [vmem:[%s197 + $0xf8] sm:$0xff] %v1059
      %p1092 = scmp.lt.s32.totalorder %s15, 1
      %s1093 = scalar_select %p1092, %s15, 1
      %s1094 = smul.addr %s1093, 32
      %s1095 = smul.addr %s1094, 8
      %s1096 = scalar_lea.vmem %s4, %s1095
      // Predicated region
      $region37: #{decoder_block_forward.3} parent=35 // pred_check
        %p1097 = pneg %p122
      $region38: #{decoder_block_forward.3} parent=35 // pred_check_branch
        %1099 = sbr.rel (%p1097) target = $region40
      $region39: #{decoder_block_forward.3} parent=35 // pred_region
        _
      $region40: #{decoder_block_forward.3} parent=35 // pred_fallthru
        _
    $region36: #{decoder_block_forward.3} parent=5 // pred_fallthru
      _
    %p1100 = scmp.le.s32.totalorder 2, %s10
    // Predicated region
    $region41: #{decoder_block_forward.3} parent=5 // pred_check
      %p1101 = pneg %p1100
    $region42: #{decoder_block_forward.3} parent=5 // pred_check_branch
      %1103 = sbr.rel (%p1101) target = $region44
    $region43: #{decoder_block_forward.3} parent=5 // pred_region
      %s1104 = ssub.s32 %s10, 2
      // Predicated region
      $region45: #{decoder_block_forward.3} parent=43 // pred_check
        %p1105 = pneg %p128
      $region46: #{decoder_block_forward.3} parent=43 // pred_check_branch
        %1107 = sbr.rel (%p1105) target = $region48
      $region47: #{decoder_block_forward.3} parent=43 // pred_region
        %p1108 = scmp.lt.s32.totalorder %s16, 1
        %s1109 = scalar_select %p1108, %s16, 1
        %s1110 = smul.addr %s1109, 32
        %s1111 = smul.addr %s1110, 8
        %s1112 = scalar_lea.vmem %s4, %s1111
      $region48: #{decoder_block_forward.3} parent=43 // pred_fallthru
        _
    $region44: #{decoder_block_forward.3} parent=5 // pred_fallthru
      _
  $region6: #{decoder_block_forward.3} parent=0 // loop_footer
    %s14 = sadd.s32 1, %s10
  $region7: #{decoder_block_forward.3} parent=0 // loop_footer_branch
    %9 = sbr.rel target = $region3
  $region8: #{decoder_block_forward.3} parent=0 // loop_exit
    _

</llo_original>
